<compile_context>
chip_gen: v7x
topology: tpu7x:2x2x1
jax: 0.10.0
libtpu: 0.0.40
codegen_flags: <defaults>
</compile_context>

<pallas_src>
import math
import functools

import jax
import jax.numpy as jnp
from jax import lax
from jax.experimental import pallas as pl
from jax.experimental.pallas import tpu as pltpu


# Scoped VMEM budget, sized against the smallest-VMEM generation (v7x:
# 64 MiB physical / 32 MiB default-scoped).  Tile candidates below are chosen
# to fit comfortably inside this with double-buffering on v5e/v6e/v7x.
_VMEM_LIMIT_BYTES = 32 * 1024 * 1024

# TPU vreg lane width; the token-parameter axis is zero-padded to a multiple
# of this so the (rows, T) score tile is lane-dense.
_LANE = 128


def _round_up(n, m):
    return ((n + m - 1) // m) * m


def _pick_tile(n, candidates):
    """Largest candidate that evenly divides n (falls back to n itself)."""
    for c in candidates:
        if n % c == 0:
            return c
    return n


def _gelu_exact(x):
    # torch.nn.functional.gelu default ('none') = exact erf formulation.
    return 0.5 * x * (1.0 + lax.erf(x * (1.0 / math.sqrt(2.0))))


# ----------------------------------------------------------------------------
# Kernels
# ----------------------------------------------------------------------------

def _pattention_kernel(x_ref, keys_ref, *rest, num_proj, true_t):
    """Fused Pattention for `num_proj` stacked projections.

    scores_i = x @ K_i^T * 1/sqrt(H)      (one stacked MXU matmul for all i)
    scores_i = scores_i * rsqrt(||.||^2) * sqrt(true_T)   (per projection)
    y_i      = gelu(scores_i) @ V_i
    Padded key/value rows are zero, so they contribute exactly 0 to the l2
    norm and to the output; the sqrt(T) scale uses the true token_num.
    """
    val_refs = rest[:num_proj]
    out_refs = rest[num_proj:]

    x = x_ref[...]                                   # (Nt, H)    bf16
    keys = keys_ref[...]                             # (P*Tp, H)  bf16
    t_pad = keys.shape[0] // num_proj
    inv_sqrt_h = 1.0 / math.sqrt(x.shape[-1])
    sqrt_t = math.sqrt(true_t)

    # Single MXU matmul for all projections; contract the feature axis
    # directly (no in-kernel transpose); accumulate in f32.
    s_all = lax.dot_general(
        x, keys, (((1,), (1,)), ((), ())),
        preferred_element_type=jnp.float32) * inv_sqrt_h     # (Nt, P*Tp) f32

    for i in range(num_proj):
        s = s_all[:, i * t_pad:(i + 1) * t_pad]              # lane-aligned slice
        sumsq = jnp.sum(s * s, axis=-1, keepdims=True)
        # rsqrt goes to the EUP (separate VLIW slot); eps guards zero rows.
        normed = s * (lax.rsqrt(sumsq + 1e-12) * sqrt_t)
        act = _gelu_exact(normed).astype(val_refs[i].dtype)  # bf16 MXU input
        out_refs[i][...] = jnp.dot(
            act, val_refs[i][...],
            preferred_element_type=jnp.float32).astype(out_refs[i].dtype)


def _mha_kernel(q_ref, k_ref, v_ref, o_ref, m_sc, l_sc, acc_sc, *, num_heads):
    """Flash-style (online softmax, KV-tiled) non-causal MHA for one batch row.

    Heads are contiguous Dh-wide column slices of the hidden axis, so the head
    split/merge happens with static in-kernel slices instead of JAX-side
    reshape/transpose round trips.
    """
    kv = pl.program_id(1)
    nkv = pl.num_programs(1)

    @pl.when(kv == 0)
    def _():
        m_sc[...] = jnp.full(m_sc.shape, -jnp.inf, jnp.float32)
        l_sc[...] = jnp.zeros(l_sc.shape, jnp.float32)
        acc_sc[...] = jnp.zeros(acc_sc.shape, jnp.float32)

    q = q_ref[0]                                     # (S, H)   bf16
    k = k_ref[0]                                     # (Tk, H)  bf16
    v = v_ref[0]                                     # (Tk, H)  bf16
    dh = q.shape[-1] // num_heads
    scale = 1.0 / math.sqrt(dh)

    for h in range(num_heads):
        qh = q[:, h * dh:(h + 1) * dh]
        kh = k[:, h * dh:(h + 1) * dh]
        vh = v[:, h * dh:(h + 1) * dh]
        s = lax.dot_general(qh, kh, (((1,), (1,)), ((), ())),
                            preferred_element_type=jnp.float32) * scale  # (S, Tk)
        m_prev = m_sc[h]                                                 # (S, 1)
        m_new = jnp.maximum(m_prev, jnp.max(s, axis=-1, keepdims=True))
        alpha = jnp.exp(m_prev - m_new)
        p = jnp.exp(s - m_new)
        l_sc[h] = alpha * l_sc[h] + jnp.sum(p, axis=-1, keepdims=True)
        acc_sc[h] = alpha * acc_sc[h] + jnp.dot(
            p.astype(vh.dtype), vh, preferred_element_type=jnp.float32)
        m_sc[h] = m_new

    @pl.when(kv == nkv - 1)
    def _():
        for h in range(num_heads):
            inv_l = pl.reciprocal(l_sc[h], approx=True)   # EUP reciprocal
            o_ref[0, :, h * dh:(h + 1) * dh] = (
                acc_sc[h] * inv_l).astype(o_ref.dtype)


def _linear_kernel(x_ref, w_ref, b_ref, o_ref):
    """y = x @ W^T + b (PyTorch nn.Linear convention), no in-kernel transpose."""
    y = lax.dot_general(x_ref[...], w_ref[...], (((1,), (1,)), ((), ())),
                        preferred_element_type=jnp.float32)
    o_ref[...] = (y + b_ref[...]).astype(o_ref.dtype)


# ----------------------------------------------------------------------------
# Pallas wrappers
# ----------------------------------------------------------------------------

def pattention(x2d, keys_stacked, value_list, *, true_t, out_dtype=jnp.bfloat16):
    """x2d: (N, H); keys_stacked: (P*Tp, H); value_list: P arrays of (Tp, Hout)."""
    num_proj = len(value_list)
    N, H = x2d.shape
    t_pad, Hout = value_list[0].shape
    nt = _pick_tile(N, (512, 256, 128, 64, 32, 16, 8))

    cost = pl.CostEstimate(
        flops=int(2 * N * H * num_proj * t_pad + 2 * N * t_pad * Hout * num_proj),
        transcendentals=int(2 * N * num_proj * t_pad),
        bytes_accessed=int(2 * (N * H + 2 * num_proj * t_pad * H
                                + num_proj * N * Hout)),
    )

    in_specs = [
        pl.BlockSpec((nt, H), lambda i: (i, 0)),
        pl.BlockSpec((num_proj * t_pad, H), lambda i: (0, 0)),
    ] + [pl.BlockSpec((t_pad, Hout), lambda i: (0, 0)) for _ in range(num_proj)]
    out_specs = [pl.BlockSpec((nt, Hout), lambda i: (i, 0)) for _ in range(num_proj)]
    out_shape = [jax.ShapeDtypeStruct((N, Hout), out_dtype) for _ in range(num_proj)]

    outs = pl.pallas_call(
        functools.partial(_pattention_kernel, num_proj=num_proj, true_t=true_t),
        out_shape=out_shape,
        grid=(N // nt,),
        in_specs=in_specs,
        out_specs=out_specs,
        compiler_params=pltpu.CompilerParams(
            dimension_semantics=("parallel",),
            vmem_limit_bytes=_VMEM_LIMIT_BYTES),
        cost_estimate=cost,
    )(x2d, keys_stacked, *value_list)
    return tuple(outs)


def multi_head_attention(q, k, v, *, num_heads, out_dtype=jnp.bfloat16):
    """q, k, v: (B, S, H) bf16; non-causal softmax MHA over KV tiles."""
    B, S, H = q.shape
    dh = H // num_heads
    tk = _pick_tile(S, (1024, 512, 256, 128))       # KV tile (flash-style)
    # TODO(synk): query-axis tiling for very long sequences not implemented.

    cost = pl.CostEstimate(
        flops=int(4 * B * S * S * H),
        transcendentals=int(B * num_heads * S * S),
        bytes_accessed=int(2 * 4 * B * S * H),
    )

    q_spec = pl.BlockSpec((1, S, H), lambda b, j: (b, 0, 0))
    kv_spec = pl.BlockSpec((1, tk, H), lambda b, j: (b, j, 0))

    return pl.pallas_call(
        functools.partial(_mha_kernel, num_heads=num_heads),
        out_shape=jax.ShapeDtypeStruct((B, S, H), out_dtype),
        grid=(B, S // tk),
        in_specs=[q_spec, kv_spec, kv_spec],
        out_specs=pl.BlockSpec((1, S, H), lambda b, j: (b, 0, 0)),
        scratch_shapes=[
            pltpu.VMEM((num_heads, S, 1), jnp.float32),   # running max
            pltpu.VMEM((num_heads, S, 1), jnp.float32),   # running denom
            pltpu.VMEM((num_heads, S, dh), jnp.float32),  # running accumulator
        ],
        compiler_params=pltpu.CompilerParams(
            dimension_semantics=("parallel", "arbitrary"),
            vmem_limit_bytes=_VMEM_LIMIT_BYTES),
        cost_estimate=cost,
    )(q, k, v)


def linear(x2d, w, b, *, out_dtype=jnp.float32):
    """lm_head: x (N, H) bf16, w (V, H) bf16, b (V,) f32; tiled over (N, V)."""
    N, H = x2d.shape
    V = w.shape[0]
    nt = _pick_tile(N, (512, 256, 128, 64, 32, 16, 8))
    # V-tile capped at 1024 so (vt, H) weight stream + (nt, vt) output tile stay
    # well inside v7x's smaller VMEM with double-buffering (halve further there
    # if H is very large).
    vt = _pick_tile(V, (1024, 512, 256, 128, 64, 32, 16, 8))
    b2d = b.reshape(1, V).astype(jnp.float32)
    # TODO(synk): add a K (hidden) grid axis + f32 VMEM accumulator for hidden
    # sizes too large to keep the full feature axis resident per tile.

    cost = pl.CostEstimate(
        flops=int(2 * N * H * V),
        transcendentals=0,
        bytes_accessed=int(2 * N * H + 2 * V * H + 4 * V + 4 * N * V),
    )

    return pl.pallas_call(
        _linear_kernel,
        out_shape=jax.ShapeDtypeStruct((N, V), out_dtype),
        grid=(N // nt, V // vt),
        in_specs=[
            pl.BlockSpec((nt, H), lambda i, j: (i, 0)),
            pl.BlockSpec((vt, H), lambda i, j: (j, 0)),
            pl.BlockSpec((1, vt), lambda i, j: (0, j)),
        ],
        out_specs=pl.BlockSpec((nt, vt), lambda i, j: (i, j)),
        compiler_params=pltpu.CompilerParams(
            dimension_semantics=("parallel", "parallel"),
            vmem_limit_bytes=_VMEM_LIMIT_BYTES),
        cost_estimate=cost,
    )(x2d, w, b2d)


# ----------------------------------------------------------------------------
# TokenformerLayer forward (glue in plain JAX, hot paths in Pallas)
# ----------------------------------------------------------------------------

def init_params(key, hidden_size, vocab_size, max_seq_len, token_num):
    ks = jax.random.split(key, 16)

    def xavier(k, shape):
        fan_out, fan_in = shape
        bound = math.sqrt(6.0 / (fan_in + fan_out))
        return jax.random.uniform(
            k, shape, jnp.float32, -bound, bound).astype(jnp.bfloat16)

    # Params stored in bf16 (native MXU input dtype, half the HBM traffic);
    # only the lm_head bias stays f32 (added to the f32 accumulator).
    p = {
        "token_emb": jax.random.normal(
            ks[0], (vocab_size, hidden_size), jnp.float32).astype(jnp.bfloat16),
        "pos_emb": jax.random.normal(
            ks[1], (max_seq_len, hidden_size), jnp.float32).astype(jnp.bfloat16),
        # SelfAttention: q / k / v / out_proj as Pattention (key_tokens, value_tokens)
        "q_key": xavier(ks[2], (token_num, hidden_size)),
        "q_val": xavier(ks[3], (token_num, hidden_size)),
        "k_key": xavier(ks[4], (token_num, hidden_size)),
        "k_val": xavier(ks[5], (token_num, hidden_size)),
        "v_key": xavier(ks[6], (token_num, hidden_size)),
        "v_val": xavier(ks[7], (token_num, hidden_size)),
        "o_key": xavier(ks[8], (token_num, hidden_size)),
        "o_val": xavier(ks[9], (token_num, hidden_size)),
        # MLP Pattention
        "mlp_key": xavier(ks[10], (token_num, hidden_size)),
        "mlp_val": xavier(ks[11], (token_num, hidden_size)),
        # lm_head
        "lm_w": xavier(ks[12], (vocab_size, hidden_size)),
        "lm_b": jnp.zeros((vocab_size,), jnp.float32),
    }
    return p


@functools.partial(jax.jit, static_argnames=("num_heads",))
def tokenformer_forward(params, tokens, num_heads):
    B, S = tokens.shape
    H = params["token_emb"].shape[1]
    T = params["q_key"].shape[0]                      # true token_num
    t_pad = max(_LANE, _round_up(T, _LANE))           # lane-dense token axis

    def pad_t(a):
        a = a.astype(jnp.bfloat16)
        if a.shape[0] == t_pad:
            return a
        return jnp.pad(a, ((0, t_pad - a.shape[0]), (0, 0)))

    # Embeddings (gather glue, bf16).
    x = params["token_emb"][tokens] + params["pos_emb"][:S][None, :, :]   # (B,S,H)
    x2d = x.reshape(B * S, H)

    # SelfAttention q/k/v projections: ONE fused Pattention call (x read once,
    # one stacked x @ [Kq;Kk;Kv]^T matmul, per-projection l2-norm/gelu + @V).
    qkv_keys = jnp.concatenate(
        [pad_t(params["q_key"]), pad_t(params["k_key"]), pad_t(params["v_key"])],
        axis=0)
    q2d, k2d, v2d = pattention(
        x2d, qkv_keys,
        [pad_t(params["q_val"]), pad_t(params["k_val"]), pad_t(params["v_val"])],
        true_t=T, out_dtype=jnp.bfloat16)

    # Multi-head softmax attention (non-causal); head split is done inside the
    # kernel with static column slices, so no JAX reshape/transpose round trips.
    ctx = multi_head_attention(
        q2d.reshape(B, S, H), k2d.reshape(B, S, H), v2d.reshape(B, S, H),
        num_heads=num_heads)
    ctx2d = ctx.reshape(B * S, H)

    # Output projection + MLP (single-projection Pattention calls).
    (attn_out,) = pattention(ctx2d, pad_t(params["o_key"]),
                             [pad_t(params["o_val"])],
                             true_t=T, out_dtype=jnp.bfloat16)
    (mlp_out,) = pattention(attn_out, pad_t(params["mlp_key"]),
                            [pad_t(params["mlp_val"])],
                            true_t=T, out_dtype=jnp.bfloat16)

    # lm_head (dropout = eval-mode identity); logits in f32.
    logits = linear(mlp_out, params["lm_w"].astype(jnp.bfloat16),
                    params["lm_b"], out_dtype=jnp.float32)
    return logits.reshape(B, S, -1)


if __name__ == "__main__":
    hidden_size = 32
    vocab_size = 64
    num_heads = 4
    max_seq_len = 16
    token_num = 10
    B, S = 2, 8

    key = jax.random.PRNGKey(0)
    pkey, xkey = jax.random.split(key)
    params = init_params(pkey, hidden_size, vocab_size, max_seq_len, token_num)
    tokens = jax.random.randint(xkey, (B, S), 0, vocab_size, dtype=jnp.int32)

    logits = tokenformer_forward(params, tokens, num_heads)
    jax.block_until_ready(logits)
    assert logits.shape == (B, S, vocab_size)
    assert bool(jnp.all(jnp.isfinite(logits)))
    print("KERNEL_OK")
</pallas_src>

<mosaic_0001>
module attributes {stable_mosaic.version = 11 : i64} {
  func.func @_pattention_kernel(%arg0: i32, %arg1: memref<16x32xbf16, #tpu.memory_space<vmem>>, %arg2: memref<128x32xbf16, #tpu.memory_space<vmem>>, %arg3: memref<128x32xbf16, #tpu.memory_space<vmem>>, %arg4: memref<16x32xbf16, #tpu.memory_space<vmem>>) attributes {dimension_semantics = [#tpu.dimension_semantics<parallel>], iteration_bounds = array<i64: 1>, scalar_prefetch = 0 : i64, scratch_operands = 0 : i64, tpu.core_type = #tpu.core_type<tc>, window_params = [{transform_indices = @transform_0, window_bounds = array<i64: 16, 32>}, {pipeline_mode = #tpu.pipeline_mode<synchronous>, transform_indices = @transform_1, window_bounds = array<i64: 128, 32>}, {pipeline_mode = #tpu.pipeline_mode<synchronous>, transform_indices = @transform_2, window_bounds = array<i64: 128, 32>}, {transform_indices = @transform_3, window_bounds = array<i64: 16, 32>}]} {
    %c0 = arith.constant 0 : index
    %c0_0 = arith.constant 0 : index
    %0 = vector.load %arg1[%c0, %c0_0] : memref<16x32xbf16, #tpu.memory_space<vmem>>, vector<16x32xbf16>
    %c0_1 = arith.constant 0 : index
    %c0_2 = arith.constant 0 : index
    %1 = vector.load %arg2[%c0_1, %c0_2] : memref<128x32xbf16, #tpu.memory_space<vmem>>, vector<128x32xbf16>
    %cst = arith.constant dense<0.000000e+00> : vector<16x128xf32>
    %2 = tpu.matmul %0, %1, %cst {dimension_numbers = #tpu.dot_dimension_numbers<[1], [1], [0], [0], [0, 0, 1, 0], [], []>} : vector<16x32xbf16>, vector<128x32xbf16>, vector<16x128xf32> -> vector<16x128xf32>
    %cst_3 = arith.constant 0.176776692 : f32
    %3 = vector.broadcast %cst_3 : f32 to vector<16x128xf32>
    %4 = arith.mulf %2, %3 : vector<16x128xf32>
    %5 = arith.mulf %4, %4 : vector<16x128xf32>
    %cst_4 = arith.constant dense<0.000000e+00> : vector<16xf32>
    %6 = vector.multi_reduction <add>, %5, %cst_4 [1] : vector<16x128xf32> to vector<16xf32>
    %7 = vector.shape_cast %6 : vector<16xf32> to vector<16x1xf32>
    %cst_5 = arith.constant 9.99999996E-13 : f32
    %8 = vector.broadcast %cst_5 : f32 to vector<16x1xf32>
    %9 = arith.addf %7, %8 : vector<16x1xf32>
    %10 = math.rsqrt %9 : vector<16x1xf32>
    %cst_6 = arith.constant 3.1622777 : f32
    %11 = vector.broadcast %cst_6 : f32 to vector<16x1xf32>
    %12 = arith.mulf %10, %11 : vector<16x1xf32>
    %13 = vector.broadcast %12 : vector<16x1xf32> to vector<16x128xf32>
    %14 = arith.mulf %4, %13 : vector<16x128xf32>
    %cst_7 = arith.constant 5.000000e-01 : f32
    %15 = vector.broadcast %cst_7 : f32 to vector<16x128xf32>
    %16 = arith.mulf %15, %14 : vector<16x128xf32>
    %cst_8 = arith.constant 0.707106769 : f32
    %17 = vector.broadcast %cst_8 : f32 to vector<16x128xf32>
    %18 = arith.mulf %14, %17 : vector<16x128xf32>
    %19 = math.erf %18 : vector<16x128xf32>
    %cst_9 = arith.constant 1.000000e+00 : f32
    %20 = vector.broadcast %cst_9 : f32 to vector<16x128xf32>
    %21 = arith.addf %20, %19 : vector<16x128xf32>
    %22 = arith.mulf %16, %21 : vector<16x128xf32>
    %23 = arith.truncf %22 : vector<16x128xf32> to vector<16x128xbf16>
    %c0_10 = arith.constant 0 : index
    %c0_11 = arith.constant 0 : index
    %24 = vector.load %arg3[%c0_10, %c0_11] : memref<128x32xbf16, #tpu.memory_space<vmem>>, vector<128x32xbf16>
    %cst_12 = arith.constant dense<0.000000e+00> : vector<16x32xf32>
    %25 = tpu.matmul %23, %24, %cst_12 {dimension_numbers = #tpu.dot_dimension_numbers<[1], [0], [0], [1], [0, 0, 1, 1], [], []>} : vector<16x128xbf16>, vector<128x32xbf16>, vector<16x32xf32> -> vector<16x32xf32>
    %26 = arith.truncf %25 : vector<16x32xf32> to vector<16x32xbf16>
    %c0_13 = arith.constant 0 : index
    %c0_14 = arith.constant 0 : index
    %27 = vector.load %arg4[%c0_13, %c0_14] : memref<16x32xbf16, #tpu.memory_space<vmem>>, vector<16x32xbf16>
    tpu.vector_store %arg4[%c0_13, %c0_14], %26 {strides = array<i32>} : memref<16x32xbf16, #tpu.memory_space<vmem>>, vector<16x32xbf16>,
    return
  }
  func.func @transform_0(%arg0: i32) -> (i32, i32) {
    %c0_i32 = arith.constant 0 : i32
    %c0_i32_0 = arith.constant 0 : i32
    return %arg0, %c0_i32 : i32, i32
  }
  func.func @transform_1(%arg0: i32) -> (i32, i32) {
    %c0_i32 = arith.constant 0 : i32
    %c0_i32_0 = arith.constant 0 : i32
    %c0_i32_1 = arith.constant 0 : i32
    return %c0_i32, %c0_i32_0 : i32, i32
  }
  func.func @transform_2(%arg0: i32) -> (i32, i32) {
    %c0_i32 = arith.constant 0 : i32
    %c0_i32_0 = arith.constant 0 : i32
    %c0_i32_1 = arith.constant 0 : i32
    return %c0_i32, %c0_i32_0 : i32, i32
  }
  func.func @transform_3(%arg0: i32) -> (i32, i32) {
    %c0_i32 = arith.constant 0 : i32
    %c0_i32_0 = arith.constant 0 : i32
    return %arg0, %c0_i32 : i32, i32
  }
}

module attributes {stable_mosaic.version = 11 : i64} {
  func.func @_pattention_kernel(%arg0: i32, %arg1: memref<16x32xbf16, #tpu.memory_space<vmem>>, %arg2: memref<384x32xbf16, #tpu.memory_space<vmem>>, %arg3: memref<128x32xbf16, #tpu.memory_space<vmem>>, %arg4: memref<128x32xbf16, #tpu.memory_space<vmem>>, %arg5: memref<128x32xbf16, #tpu.memory_space<vmem>>, %arg6: memref<16x32xbf16, #tpu.memory_space<vmem>>, %arg7: memref<16x32xbf16, #tpu.memory_space<vmem>>, %arg8: memref<16x32xbf16, #tpu.memory_space<vmem>>) attributes {dimension_semantics = [#tpu.dimension_semantics<parallel>], iteration_bounds = array<i64: 1>, scalar_prefetch = 0 : i64, scratch_operands = 0 : i64, tpu.core_type = #tpu.core_type<tc>, window_params = [{transform_indices = @transform_0, window_bounds = array<i64: 16, 32>}, {pipeline_mode = #tpu.pipeline_mode<synchronous>, transform_indices = @transform_1, window_bounds = array<i64: 384, 32>}, {pipeline_mode = #tpu.pipeline_mode<synchronous>, transform_indices = @transform_2, window_bounds = array<i64: 128, 32>}, {pipeline_mode = #tpu.pipeline_mode<synchronous>, transform_indices = @transform_3, window_bounds = array<i64: 128, 32>}, {pipeline_mode = #tpu.pipeline_mode<synchronous>, transform_indices = @transform_4, window_bounds = array<i64: 128, 32>}, {transform_indices = @transform_5, window_bounds = array<i64: 16, 32>}, {transform_indices = @transform_6, window_bounds = array<i64: 16, 32>}, {transform_indices = @transform_7, window_bounds = array<i64: 16, 32>}]} {
    %c0 = arith.constant 0 : index
    %c0_0 = arith.constant 0 : index
    %0 = vector.load %arg1[%c0, %c0_0] : memref<16x32xbf16, #tpu.memory_space<vmem>>, vector<16x32xbf16>
    %c0_1 = arith.constant 0 : index
    %c0_2 = arith.constant 0 : index
    %1 = vector.load %arg2[%c0_1, %c0_2] : memref<384x32xbf16, #tpu.memory_space<vmem>>, vector<384x32xbf16>
    %cst = arith.constant dense<0.000000e+00> : vector<16x384xf32>
    %2 = tpu.matmul %0, %1, %cst {dimension_numbers = #tpu.dot_dimension_numbers<[1], [1], [0], [0], [0, 0, 1, 0], [], []>} : vector<16x32xbf16>, vector<384x32xbf16>, vector<16x384xf32> -> vector<16x384xf32>
    %cst_3 = arith.constant 0.176776692 : f32
    %3 = vector.broadcast %cst_3 : f32 to vector<16x384xf32>
    %4 = arith.mulf %2, %3 : vector<16x384xf32>
    %5 = vector.extract_strided_slice %4 {offsets = [0, 0], sizes = [16, 128], strides = [1, 1]} : vector<16x384xf32> to vector<16x128xf32>
    %6 = arith.mulf %5, %5 : vector<16x128xf32>
    %cst_4 = arith.constant dense<0.000000e+00> : vector<16xf32>
    %7 = vector.multi_reduction <add>, %6, %cst_4 [1] : vector<16x128xf32> to vector<16xf32>
    %8 = vector.shape_cast %7 : vector<16xf32> to vector<16x1xf32>
    %cst_5 = arith.constant 9.99999996E-13 : f32
    %9 = vector.broadcast %cst_5 : f32 to vector<16x1xf32>
    %10 = arith.addf %8, %9 : vector<16x1xf32>
    %11 = math.rsqrt %10 : vector<16x1xf32>
    %cst_6 = arith.constant 3.1622777 : f32
    %12 = vector.broadcast %cst_6 : f32 to vector<16x1xf32>
    %13 = arith.mulf %11, %12 : vector<16x1xf32>
    %14 = vector.broadcast %13 : vector<16x1xf32> to vector<16x128xf32>
    %15 = arith.mulf %5, %14 : vector<16x128xf32>
    %cst_7 = arith.constant 5.000000e-01 : f32
    %16 = vector.broadcast %cst_7 : f32 to vector<16x128xf32>
    %17 = arith.mulf %16, %15 : vector<16x128xf32>
    %cst_8 = arith.constant 0.707106769 : f32
    %18 = vector.broadcast %cst_8 : f32 to vector<16x128xf32>
    %19 = arith.mulf %15, %18 : vector<16x128xf32>
    %20 = math.erf %19 : vector<16x128xf32>
    %cst_9 = arith.constant 1.000000e+00 : f32
    %21 = vector.broadcast %cst_9 : f32 to vector<16x128xf32>
    %22 = arith.addf %21, %20 : vector<16x128xf32>
    %23 = arith.mulf %17, %22 : vector<16x128xf32>
    %24 = arith.truncf %23 : vector<16x128xf32> to vector<16x128xbf16>
    %c0_10 = arith.constant 0 : index
    %c0_11 = arith.constant 0 : index
    %25 = vector.load %arg3[%c0_10, %c0_11] : memref<128x32xbf16, #tpu.memory_space<vmem>>, vector<128x32xbf16>
    %cst_12 = arith.constant dense<0.000000e+00> : vector<16x32xf32>
    %26 = tpu.matmul %24, %25, %cst_12 {dimension_numbers = #tpu.dot_dimension_numbers<[1], [0], [0], [1], [0, 0, 1, 1], [], []>} : vector<16x128xbf16>, vector<128x32xbf16>, vector<16x32xf32> -> vector<16x32xf32>
    %27 = arith.truncf %26 : vector<16x32xf32> to vector<16x32xbf16>
    %c0_13 = arith.constant 0 : index
    %c0_14 = arith.constant 0 : index
    %28 = vector.load %arg6[%c0_13, %c0_14] : memref<16x32xbf16, #tpu.memory_space<vmem>>, vector<16x32xbf16>
    tpu.vector_store %arg6[%c0_13, %c0_14], %27 {strides = array<i32>} : memref<16x32xbf16, #tpu.memory_space<vmem>>, vector<16x32xbf16>,
    %29 = vector.extract_strided_slice %4 {offsets = [0, 128], sizes = [16, 128], strides = [1, 1]} : vector<16x384xf32> to vector<16x128xf32>
    %30 = arith.mulf %29, %29 : vector<16x128xf32>
    %cst_15 = arith.constant dense<0.000000e+00> : vector<16xf32>
    %31 = vector.multi_reduction <add>, %30, %cst_15 [1] : vector<16x128xf32> to vector<16xf32>
    %32 = vector.shape_cast %31 : vector<16xf32> to vector<16x1xf32>
    %cst_16 = arith.constant 9.99999996E-13 : f32
    %33 = vector.broadcast %cst_16 : f32 to vector<16x1xf32>
    %34 = arith.addf %32, %33 : vector<16x1xf32>
    %35 = math.rsqrt %34 : vector<16x1xf32>
    %cst_17 = arith.constant 3.1622777 : f32
    %36 = vector.broadcast %cst_17 : f32 to vector<16x1xf32>
    %37 = arith.mulf %35, %36 : vector<16x1xf32>
    %38 = vector.broadcast %37 : vector<16x1xf32> to vector<16x128xf32>
    %39 = arith.mulf %29, %38 : vector<16x128xf32>
    %cst_18 = arith.constant 5.000000e-01 : f32
    %40 = vector.broadcast %cst_18 : f32 to vector<16x128xf32>
    %41 = arith.mulf %40, %39 : vector<16x128xf32>
    %cst_19 = arith.constant 0.707106769 : f32
    %42 = vector.broadcast %cst_19 : f32 to vector<16x128xf32>
    %43 = arith.mulf %39, %42 : vector<16x128xf32>
    %44 = math.erf %43 : vector<16x128xf32>
    %cst_20 = arith.constant 1.000000e+00 : f32
    %45 = vector.broadcast %cst_20 : f32 to vector<16x128xf32>
    %46 = arith.addf %45, %44 : vector<16x128xf32>
    %47 = arith.mulf %41, %46 : vector<16x128xf32>
    %48 = arith.truncf %47 : vector<16x128xf32> to vector<16x128xbf16>
    %c0_21 = arith.constant 0 : index
    %c0_22 = arith.constant 0 : index
    %49 = vector.load %arg4[%c0_21, %c0_22] : memref<128x32xbf16, #tpu.memory_space<vmem>>, vector<128x32xbf16>
    %cst_23 = arith.constant dense<0.000000e+00> : vector<16x32xf32>
    %50 = tpu.matmul %48, %49, %cst_23 {dimension_numbers = #tpu.dot_dimension_numbers<[1], [0], [0], [1], [0, 0, 1, 1], [], []>} : vector<16x128xbf16>, vector<128x32xbf16>, vector<16x32xf32> -> vector<16x32xf32>
    %51 = arith.truncf %50 : vector<16x32xf32> to vector<16x32xbf16>
    %c0_24 = arith.constant 0 : index
    %c0_25 = arith.constant 0 : index
    %52 = vector.load %arg7[%c0_24, %c0_25] : memref<16x32xbf16, #tpu.memory_space<vmem>>, vector<16x32xbf16>
    tpu.vector_store %arg7[%c0_24, %c0_25], %51 {strides = array<i32>} : memref<16x32xbf16, #tpu.memory_space<vmem>>, vector<16x32xbf16>,
    %53 = vector.extract_strided_slice %4 {offsets = [0, 256], sizes = [16, 128], strides = [1, 1]} : vector<16x384xf32> to vector<16x128xf32>
    %54 = arith.mulf %53, %53 : vector<16x128xf32>
    %cst_26 = arith.constant dense<0.000000e+00> : vector<16xf32>
    %55 = vector.multi_reduction <add>, %54, %cst_26 [1] : vector<16x128xf32> to vector<16xf32>
    %56 = vector.shape_cast %55 : vector<16xf32> to vector<16x1xf32>
    %cst_27 = arith.constant 9.99999996E-13 : f32
    %57 = vector.broadcast %cst_27 : f32 to vector<16x1xf32>
    %58 = arith.addf %56, %57 : vector<16x1xf32>
    %59 = math.rsqrt %58 : vector<16x1xf32>
    %cst_28 = arith.constant 3.1622777 : f32
    %60 = vector.broadcast %cst_28 : f32 to vector<16x1xf32>
    %61 = arith.mulf %59, %60 : vector<16x1xf32>
    %62 = vector.broadcast %61 : vector<16x1xf32> to vector<16x128xf32>
    %63 = arith.mulf %53, %62 : vector<16x128xf32>
    %cst_29 = arith.constant 5.000000e-01 : f32
    %64 = vector.broadcast %cst_29 : f32 to vector<16x128xf32>
    %65 = arith.mulf %64, %63 : vector<16x128xf32>
    %cst_30 = arith.constant 0.707106769 : f32
    %66 = vector.broadcast %cst_30 : f32 to vector<16x128xf32>
    %67 = arith.mulf %63, %66 : vector<16x128xf32>
    %68 = math.erf %67 : vector<16x128xf32>
    %cst_31 = arith.constant 1.000000e+00 : f32
    %69 = vector.broadcast %cst_31 : f32 to vector<16x128xf32>
    %70 = arith.addf %69, %68 : vector<16x128xf32>
    %71 = arith.mulf %65, %70 : vector<16x128xf32>
    %72 = arith.truncf %71 : vector<16x128xf32> to vector<16x128xbf16>
    %c0_32 = arith.constant 0 : index
    %c0_33 = arith.constant 0 : index
    %73 = vector.load %arg5[%c0_32, %c0_33] : memref<128x32xbf16, #tpu.memory_space<vmem>>, vector<128x32xbf16>
    %cst_34 = arith.constant dense<0.000000e+00> : vector<16x32xf32>
    %74 = tpu.matmul %72, %73, %cst_34 {dimension_numbers = #tpu.dot_dimension_numbers<[1], [0], [0], [1], [0, 0, 1, 1], [], []>} : vector<16x128xbf16>, vector<128x32xbf16>, vector<16x32xf32> -> vector<16x32xf32>
    %75 = arith.truncf %74 : vector<16x32xf32> to vector<16x32xbf16>
    %c0_35 = arith.constant 0 : index
    %c0_36 = arith.constant 0 : index
    %76 = vector.load %arg8[%c0_35, %c0_36] : memref<16x32xbf16, #tpu.memory_space<vmem>>, vector<16x32xbf16>
    tpu.vector_store %arg8[%c0_35, %c0_36], %75 {strides = array<i32>} : memref<16x32xbf16, #tpu.memory_space<vmem>>, vector<16x32xbf16>,
    return
  }
  func.func @transform_0(%arg0: i32) -> (i32, i32) {
    %c0_i32 = arith.constant 0 : i32
    %c0_i32_0 = arith.constant 0 : i32
    return %arg0, %c0_i32 : i32, i32
  }
  func.func @transform_1(%arg0: i32) -> (i32, i32) {
    %c0_i32 = arith.constant 0 : i32
    %c0_i32_0 = arith.constant 0 : i32
    %c0_i32_1 = arith.constant 0 : i32
    return %c0_i32, %c0_i32_0 : i32, i32
  }
  func.func @transform_2(%arg0: i32) -> (i32, i32) {
    %c0_i32 = arith.constant 0 : i32
    %c0_i32_0 = arith.constant 0 : i32
    %c0_i32_1 = arith.constant 0 : i32
    return %c0_i32, %c0_i32_0 : i32, i32
  }
  func.func @transform_3(%arg0: i32) -> (i32, i32) {
    %c0_i32 = arith.constant 0 : i32
    %c0_i32_0 = arith.constant 0 : i32
    %c0_i32_1 = arith.constant 0 : i32
    return %c0_i32, %c0_i32_0 : i32, i32
  }
  func.func @transform_4(%arg0: i32) -> (i32, i32) {
    %c0_i32 = arith.constant 0 : i32
    %c0_i32_0 = arith.constant 0 : i32
    %c0_i32_1 = arith.constant 0 : i32
    return %c0_i32, %c0_i32_0 : i32, i32
  }
  func.func @transform_5(%arg0: i32) -> (i32, i32) {
    %c0_i32 = arith.constant 0 : i32
    %c0_i32_0 = arith.constant 0 : i32
    return %arg0, %c0_i32 : i32, i32
  }
  func.func @transform_6(%arg0: i32) -> (i32, i32) {
    %c0_i32 = arith.constant 0 : i32
    %c0_i32_0 = arith.constant 0 : i32
    return %arg0, %c0_i32 : i32, i32
  }
  func.func @transform_7(%arg0: i32) -> (i32, i32) {
    %c0_i32 = arith.constant 0 : i32
    %c0_i32_0 = arith.constant 0 : i32
    return %arg0, %c0_i32 : i32, i32
  }
}

module attributes {stable_mosaic.version = 11 : i64} {
  func.func @_linear_kernel(%arg0: i32, %arg1: i32, %arg2: memref<16x32xbf16, #tpu.memory_space<vmem>>, %arg3: memref<64x32xbf16, #tpu.memory_space<vmem>>, %arg4: memref<1x64xf32, #tpu.memory_space<vmem>>, %arg5: memref<16x64xf32, #tpu.memory_space<vmem>>) attributes {dimension_semantics = [#tpu.dimension_semantics<parallel>, #tpu.dimension_semantics<parallel>], iteration_bounds = array<i64: 1, 1>, scalar_prefetch = 0 : i64, scratch_operands = 0 : i64, tpu.core_type = #tpu.core_type<tc>, window_params = [{transform_indices = @transform_0, window_bounds = array<i64: 16, 32>}, {transform_indices = @transform_1, window_bounds = array<i64: 64, 32>}, {transform_indices = @transform_2, window_bounds = array<i64: 1, 64>}, {transform_indices = @transform_3, window_bounds = array<i64: 16, 64>}]} {
    %c0 = arith.constant 0 : index
    %c0_0 = arith.constant 0 : index
    %0 = vector.load %arg2[%c0, %c0_0] : memref<16x32xbf16, #tpu.memory_space<vmem>>, vector<16x32xbf16>
    %c0_1 = arith.constant 0 : index
    %c0_2 = arith.constant 0 : index
    %1 = vector.load %arg3[%c0_1, %c0_2] : memref<64x32xbf16, #tpu.memory_space<vmem>>, vector<64x32xbf16>
    %cst = arith.constant dense<0.000000e+00> : vector<16x64xf32>
    %2 = tpu.matmul %0, %1, %cst {dimension_numbers = #tpu.dot_dimension_numbers<[1], [1], [0], [0], [0, 0, 1, 0], [], []>} : vector<16x32xbf16>, vector<64x32xbf16>, vector<16x64xf32> -> vector<16x64xf32>
    %c0_3 = arith.constant 0 : index
    %c0_4 = arith.constant 0 : index
    %3 = vector.load %arg4[%c0_3, %c0_4] : memref<1x64xf32, #tpu.memory_space<vmem>>, vector<1x64xf32>
    %4 = vector.broadcast %3 : vector<1x64xf32> to vector<16x64xf32>
    %5 = arith.addf %2, %4 : vector<16x64xf32>
    %c0_5 = arith.constant 0 : index
    %c0_6 = arith.constant 0 : index
    %6 = vector.load %arg5[%c0_5, %c0_6] : memref<16x64xf32, #tpu.memory_space<vmem>>, vector<16x64xf32>
    tpu.vector_store %arg5[%c0_5, %c0_6], %5 {strides = array<i32>} : memref<16x64xf32, #tpu.memory_space<vmem>>, vector<16x64xf32>,
    return
  }
  func.func @transform_0(%arg0: i32, %arg1: i32) -> (i32, i32) {
    %c0_i32 = arith.constant 0 : i32
    %c0_i32_0 = arith.constant 0 : i32
    return %arg0, %c0_i32 : i32, i32
  }
  func.func @transform_1(%arg0: i32, %arg1: i32) -> (i32, i32) {
    %c0_i32 = arith.constant 0 : i32
    %c0_i32_0 = arith.constant 0 : i32
    return %arg1, %c0_i32 : i32, i32
  }
  func.func @transform_2(%arg0: i32, %arg1: i32) -> (i32, i32) {
    %c0_i32 = arith.constant 0 : i32
    %c0_i32_0 = arith.constant 0 : i32
    return %c0_i32, %arg1 : i32, i32
  }
  func.func @transform_3(%arg0: i32, %arg1: i32) -> (i32, i32) {
    %c0_i32 = arith.constant 0 : i32
    return %arg0, %arg1 : i32, i32
  }
}

module attributes {stable_mosaic.version = 11 : i64} {
  func.func @_mha_kernel(%arg0: i32, %arg1: i32, %arg2: memref<1x8x32xbf16, #tpu.memory_space<vmem>>, %arg3: memref<1x8x32xbf16, #tpu.memory_space<vmem>>, %arg4: memref<1x8x32xbf16, #tpu.memory_space<vmem>>, %arg5: memref<1x8x32xbf16, #tpu.memory_space<vmem>>, %arg6: memref<4x8x1xf32, #tpu.memory_space<vmem>>, %arg7: memref<4x8x1xf32, #tpu.memory_space<vmem>>, %arg8: memref<4x8x8xf32, #tpu.memory_space<vmem>>) attributes {dimension_semantics = [#tpu.dimension_semantics<parallel>, #tpu.dimension_semantics<arbitrary>], iteration_bounds = array<i64: 2, 1>, scalar_prefetch = 0 : i64, scratch_operands = 3 : i64, tpu.core_type = #tpu.core_type<tc>, window_params = [{transform_indices = @transform_0, window_bounds = array<i64: 1, 8, 32>}, {transform_indices = @transform_1, window_bounds = array<i64: 1, 8, 32>}, {transform_indices = @transform_2, window_bounds = array<i64: 1, 8, 32>}, {transform_indices = @transform_3, window_bounds = array<i64: 1, 8, 32>}]} {
    %c0_i32 = arith.constant 0 : i32
    %0 = arith.cmpi eq, %arg1, %c0_i32 : i32
    %1 = arith.extui %0 : i1 to i32
    %c0_i32_0 = arith.constant 0 : i32
    %2 = arith.cmpi ne, %1, %c0_i32_0 : i32
    scf.if %2 {
      %cst_99 = arith.constant 0xFF800000 : f32
      %164 = vector.broadcast %cst_99 : f32 to vector<4x8x1xf32>
      %c0_100 = arith.constant 0 : index
      %c0_101 = arith.constant 0 : index
      %c0_102 = arith.constant 0 : index
      %165 = vector.load %arg6[%c0_100, %c0_101, %c0_102] : memref<4x8x1xf32, #tpu.memory_space<vmem>>, vector<4x8x1xf32>
      tpu.vector_store %arg6[%c0_100, %c0_101, %c0_102], %164 {strides = array<i32>} : memref<4x8x1xf32, #tpu.memory_space<vmem>>, vector<4x8x1xf32>,
      %cst_103 = arith.constant 0.000000e+00 : f32
      %166 = vector.broadcast %cst_103 : f32 to vector<4x8x1xf32>
      %c0_104 = arith.constant 0 : index
      %c0_105 = arith.constant 0 : index
      %c0_106 = arith.constant 0 : index
      %167 = vector.load %arg7[%c0_104, %c0_105, %c0_106] : memref<4x8x1xf32, #tpu.memory_space<vmem>>, vector<4x8x1xf32>
      tpu.vector_store %arg7[%c0_104, %c0_105, %c0_106], %166 {strides = array<i32>} : memref<4x8x1xf32, #tpu.memory_space<vmem>>, vector<4x8x1xf32>,
      %cst_107 = arith.constant 0.000000e+00 : f32
      %168 = vector.broadcast %cst_107 : f32 to vector<4x8x8xf32>
      %c0_108 = arith.constant 0 : index
      %c0_109 = arith.constant 0 : index
      %c0_110 = arith.constant 0 : index
      %169 = vector.load %arg8[%c0_108, %c0_109, %c0_110] : memref<4x8x8xf32, #tpu.memory_space<vmem>>, vector<4x8x8xf32>
      tpu.vector_store %arg8[%c0_108, %c0_109, %c0_110], %168 {strides = array<i32>} : memref<4x8x8xf32, #tpu.memory_space<vmem>>, vector<4x8x8xf32>,
    } else {
    }
    %c0 = arith.constant 0 : index
    %c0_1 = arith.constant 0 : index
    %c0_2 = arith.constant 0 : index
    %3 = vector.load %arg2[%c0, %c0_1, %c0_2] : memref<1x8x32xbf16, #tpu.memory_space<vmem>>, vector<1x8x32xbf16>
    %4 = vector.shape_cast %3 : vector<1x8x32xbf16> to vector<8x32xbf16>
    %c0_3 = arith.constant 0 : index
    %c0_4 = arith.constant 0 : index
    %c0_5 = arith.constant 0 : index
    %5 = vector.load %arg3[%c0_3, %c0_4, %c0_5] : memref<1x8x32xbf16, #tpu.memory_space<vmem>>, vector<1x8x32xbf16>
    %6 = vector.shape_cast %5 : vector<1x8x32xbf16> to vector<8x32xbf16>
    %c0_6 = arith.constant 0 : index
    %c0_7 = arith.constant 0 : index
    %c0_8 = arith.constant 0 : index
    %7 = vector.load %arg4[%c0_6, %c0_7, %c0_8] : memref<1x8x32xbf16, #tpu.memory_space<vmem>>, vector<1x8x32xbf16>
    %8 = vector.shape_cast %7 : vector<1x8x32xbf16> to vector<8x32xbf16>
    %9 = vector.extract_strided_slice %4 {offsets = [0, 0], sizes = [8, 8], strides = [1, 1]} : vector<8x32xbf16> to vector<8x8xbf16>
    %10 = vector.extract_strided_slice %6 {offsets = [0, 0], sizes = [8, 8], strides = [1, 1]} : vector<8x32xbf16> to vector<8x8xbf16>
    %11 = vector.extract_strided_slice %8 {offsets = [0, 0], sizes = [8, 8], strides = [1, 1]} : vector<8x32xbf16> to vector<8x8xbf16>
    %cst = arith.constant dense<0.000000e+00> : vector<8x8xf32>
    %12 = tpu.matmul %9, %10, %cst {dimension_numbers = #tpu.dot_dimension_numbers<[1], [1], [0], [0], [0, 0, 1, 0], [], []>} : vector<8x8xbf16>, vector<8x8xbf16>, vector<8x8xf32> -> vector<8x8xf32>
    %cst_9 = arith.constant 0.353553385 : f32
    %13 = vector.broadcast %cst_9 : f32 to vector<8x8xf32>
    %14 = arith.mulf %12, %13 : vector<8x8xf32>
    %c0_10 = arith.constant 0 : index
    %c0_11 = arith.constant 0 : index
    %c0_12 = arith.constant 0 : index
    %15 = vector.load %arg6[%c0_10, %c0_11, %c0_12] : memref<4x8x1xf32, #tpu.memory_space<vmem>>, vector<1x8x1xf32>
    %16 = vector.shape_cast %15 : vector<1x8x1xf32> to vector<8x1xf32>
    %cst_13 = arith.constant dense<0xFF800000> : vector<8xf32>
    %17 = vector.multi_reduction <maximumf>, %14, %cst_13 [1] : vector<8x8xf32> to vector<8xf32>
    %18 = vector.shape_cast %17 : vector<8xf32> to vector<8x1xf32>
    %19 = arith.maximumf %16, %18 : vector<8x1xf32>
    %20 = arith.subf %16, %19 : vector<8x1xf32>
    %21 = math.exp %20 : vector<8x1xf32>
    %22 = vector.broadcast %19 : vector<8x1xf32> to vector<8x8xf32>
    %23 = arith.subf %14, %22 : vector<8x8xf32>
    %24 = math.exp %23 : vector<8x8xf32>
    %c0_14 = arith.constant 0 : index
    %c0_15 = arith.constant 0 : index
    %c0_16 = arith.constant 0 : index
    %25 = vector.load %arg7[%c0_14, %c0_15, %c0_16] : memref<4x8x1xf32, #tpu.memory_space<vmem>>, vector<1x8x1xf32>
    %26 = vector.shape_cast %25 : vector<1x8x1xf32> to vector<8x1xf32>
    %27 = arith.mulf %21, %26 : vector<8x1xf32>
    %cst_17 = arith.constant dense<0.000000e+00> : vector<8xf32>
    %28 = vector.multi_reduction <add>, %24, %cst_17 [1] : vector<8x8xf32> to vector<8xf32>
    %29 = vector.shape_cast %28 : vector<8xf32> to vector<8x1xf32>
    %30 = arith.addf %27, %29 : vector<8x1xf32>
    %c0_18 = arith.constant 0 : index
    %c0_19 = arith.constant 0 : index
    %c0_20 = arith.constant 0 : index
    %31 = vector.load %arg7[%c0_18, %c0_19, %c0_20] : memref<4x8x1xf32, #tpu.memory_space<vmem>>, vector<1x8x1xf32>
    %32 = vector.shape_cast %31 : vector<1x8x1xf32> to vector<8x1xf32>
    %33 = vector.shape_cast %30 : vector<8x1xf32> to vector<1x8x1xf32>
    tpu.vector_store %arg7[%c0_18, %c0_19, %c0_20], %33 {strides = array<i32>} : memref<4x8x1xf32, #tpu.memory_space<vmem>>, vector<1x8x1xf32>,
    %c0_21 = arith.constant 0 : index
    %c0_22 = arith.constant 0 : index
    %c0_23 = arith.constant 0 : index
    %34 = vector.load %arg8[%c0_21, %c0_22, %c0_23] : memref<4x8x8xf32, #tpu.memory_space<vmem>>, vector<1x8x8xf32>
    %35 = vector.shape_cast %34 : vector<1x8x8xf32> to vector<8x8xf32>
    %36 = vector.broadcast %21 : vector<8x1xf32> to vector<8x8xf32>
    %37 = arith.mulf %36, %35 : vector<8x8xf32>
    %38 = arith.truncf %24 : vector<8x8xf32> to vector<8x8xbf16>
    %cst_24 = arith.constant dense<0.000000e+00> : vector<8x8xf32>
    %39 = tpu.matmul %38, %11, %cst_24 {dimension_numbers = #tpu.dot_dimension_numbers<[1], [0], [0], [1], [0, 0, 1, 1], [], []>} : vector<8x8xbf16>, vector<8x8xbf16>, vector<8x8xf32> -> vector<8x8xf32>
    %40 = arith.addf %37, %39 : vector<8x8xf32>
    %c0_25 = arith.constant 0 : index
    %c0_26 = arith.constant 0 : index
    %c0_27 = arith.constant 0 : index
    %41 = vector.load %arg8[%c0_25, %c0_26, %c0_27] : memref<4x8x8xf32, #tpu.memory_space<vmem>>, vector<1x8x8xf32>
    %42 = vector.shape_cast %41 : vector<1x8x8xf32> to vector<8x8xf32>
    %43 = vector.shape_cast %40 : vector<8x8xf32> to vector<1x8x8xf32>
    tpu.vector_store %arg8[%c0_25, %c0_26, %c0_27], %43 {strides = array<i32>} : memref<4x8x8xf32, #tpu.memory_space<vmem>>, vector<1x8x8xf32>,
    %c0_28 = arith.constant 0 : index
    %c0_29 = arith.constant 0 : index
    %c0_30 = arith.constant 0 : index
    %44 = vector.load %arg6[%c0_28, %c0_29, %c0_30] : memref<4x8x1xf32, #tpu.memory_space<vmem>>, vector<1x8x1xf32>
    %45 = vector.shape_cast %44 : vector<1x8x1xf32> to vector<8x1xf32>
    %46 = vector.shape_cast %19 : vector<8x1xf32> to vector<1x8x1xf32>
    tpu.vector_store %arg6[%c0_28, %c0_29, %c0_30], %46 {strides = array<i32>} : memref<4x8x1xf32, #tpu.memory_space<vmem>>, vector<1x8x1xf32>,
    %47 = vector.extract_strided_slice %4 {offsets = [0, 8], sizes = [8, 8], strides = [1, 1]} : vector<8x32xbf16> to vector<8x8xbf16>
    %48 = vector.extract_strided_slice %6 {offsets = [0, 8], sizes = [8, 8], strides = [1, 1]} : vector<8x32xbf16> to vector<8x8xbf16>
    %49 = vector.extract_strided_slice %8 {offsets = [0, 8], sizes = [8, 8], strides = [1, 1]} : vector<8x32xbf16> to vector<8x8xbf16>
    %cst_31 = arith.constant dense<0.000000e+00> : vector<8x8xf32>
    %50 = tpu.matmul %47, %48, %cst_31 {dimension_numbers = #tpu.dot_dimension_numbers<[1], [1], [0], [0], [0, 0, 1, 0], [], []>} : vector<8x8xbf16>, vector<8x8xbf16>, vector<8x8xf32> -> vector<8x8xf32>
    %cst_32 = arith.constant 0.353553385 : f32
    %51 = vector.broadcast %cst_32 : f32 to vector<8x8xf32>
    %52 = arith.mulf %50, %51 : vector<8x8xf32>
    %c1 = arith.constant 1 : index
    %c0_33 = arith.constant 0 : index
    %c0_34 = arith.constant 0 : index
    %53 = vector.load %arg6[%c1, %c0_33, %c0_34] : memref<4x8x1xf32, #tpu.memory_space<vmem>>, vector<1x8x1xf32>
    %54 = vector.shape_cast %53 : vector<1x8x1xf32> to vector<8x1xf32>
    %cst_35 = arith.constant dense<0xFF800000> : vector<8xf32>
    %55 = vector.multi_reduction <maximumf>, %52, %cst_35 [1] : vector<8x8xf32> to vector<8xf32>
    %56 = vector.shape_cast %55 : vector<8xf32> to vector<8x1xf32>
    %57 = arith.maximumf %54, %56 : vector<8x1xf32>
    %58 = arith.subf %54, %57 : vector<8x1xf32>
    %59 = math.exp %58 : vector<8x1xf32>
    %60 = vector.broadcast %57 : vector<8x1xf32> to vector<8x8xf32>
    %61 = arith.subf %52, %60 : vector<8x8xf32>
    %62 = math.exp %61 : vector<8x8xf32>
    %c1_36 = arith.constant 1 : index
    %c0_37 = arith.constant 0 : index
    %c0_38 = arith.constant 0 : index
    %63 = vector.load %arg7[%c1_36, %c0_37, %c0_38] : memref<4x8x1xf32, #tpu.memory_space<vmem>>, vector<1x8x1xf32>
    %64 = vector.shape_cast %63 : vector<1x8x1xf32> to vector<8x1xf32>
    %65 = arith.mulf %59, %64 : vector<8x1xf32>
    %cst_39 = arith.constant dense<0.000000e+00> : vector<8xf32>
    %66 = vector.multi_reduction <add>, %62, %cst_39 [1] : vector<8x8xf32> to vector<8xf32>
    %67 = vector.shape_cast %66 : vector<8xf32> to vector<8x1xf32>
    %68 = arith.addf %65, %67 : vector<8x1xf32>
    %c1_40 = arith.constant 1 : index
    %c0_41 = arith.constant 0 : index
    %c0_42 = arith.constant 0 : index
    %69 = vector.load %arg7[%c1_40, %c0_41, %c0_42] : memref<4x8x1xf32, #tpu.memory_space<vmem>>, vector<1x8x1xf32>
    %70 = vector.shape_cast %69 : vector<1x8x1xf32> to vector<8x1xf32>
    %71 = vector.shape_cast %68 : vector<8x1xf32> to vector<1x8x1xf32>
    tpu.vector_store %arg7[%c1_40, %c0_41, %c0_42], %71 {strides = array<i32>} : memref<4x8x1xf32, #tpu.memory_space<vmem>>, vector<1x8x1xf32>,
    %c1_43 = arith.constant 1 : index
    %c0_44 = arith.constant 0 : index
    %c0_45 = arith.constant 0 : index
    %72 = vector.load %arg8[%c1_43, %c0_44, %c0_45] : memref<4x8x8xf32, #tpu.memory_space<vmem>>, vector<1x8x8xf32>
    %73 = vector.shape_cast %72 : vector<1x8x8xf32> to vector<8x8xf32>
    %74 = vector.broadcast %59 : vector<8x1xf32> to vector<8x8xf32>
    %75 = arith.mulf %74, %73 : vector<8x8xf32>
    %76 = arith.truncf %62 : vector<8x8xf32> to vector<8x8xbf16>
    %cst_46 = arith.constant dense<0.000000e+00> : vector<8x8xf32>
    %77 = tpu.matmul %76, %49, %cst_46 {dimension_numbers = #tpu.dot_dimension_numbers<[1], [0], [0], [1], [0, 0, 1, 1], [], []>} : vector<8x8xbf16>, vector<8x8xbf16>, vector<8x8xf32> -> vector<8x8xf32>
    %78 = arith.addf %75, %77 : vector<8x8xf32>
    %c1_47 = arith.constant 1 : index
    %c0_48 = arith.constant 0 : index
    %c0_49 = arith.constant 0 : index
    %79 = vector.load %arg8[%c1_47, %c0_48, %c0_49] : memref<4x8x8xf32, #tpu.memory_space<vmem>>, vector<1x8x8xf32>
    %80 = vector.shape_cast %79 : vector<1x8x8xf32> to vector<8x8xf32>
    %81 = vector.shape_cast %78 : vector<8x8xf32> to vector<1x8x8xf32>
    tpu.vector_store %arg8[%c1_47, %c0_48, %c0_49], %81 {strides = array<i32>} : memref<4x8x8xf32, #tpu.memory_space<vmem>>, vector<1x8x8xf32>,
    %c1_50 = arith.constant 1 : index
    %c0_51 = arith.constant 0 : index
    %c0_52 = arith.constant 0 : index
    %82 = vector.load %arg6[%c1_50, %c0_51, %c0_52] : memref<4x8x1xf32, #tpu.memory_space<vmem>>, vector<1x8x1xf32>
    %83 = vector.shape_cast %82 : vector<1x8x1xf32> to vector<8x1xf32>
    %84 = vector.shape_cast %57 : vector<8x1xf32> to vector<1x8x1xf32>
    tpu.vector_store %arg6[%c1_50, %c0_51, %c0_52], %84 {strides = array<i32>} : memref<4x8x1xf32, #tpu.memory_space<vmem>>, vector<1x8x1xf32>,
    %85 = vector.extract_strided_slice %4 {offsets = [0, 16], sizes = [8, 8], strides = [1, 1]} : vector<8x32xbf16> to vector<8x8xbf16>
    %86 = vector.extract_strided_slice %6 {offsets = [0, 16], sizes = [8, 8], strides = [1, 1]} : vector<8x32xbf16> to vector<8x8xbf16>
    %87 = vector.extract_strided_slice %8 {offsets = [0, 16], sizes = [8, 8], strides = [1, 1]} : vector<8x32xbf16> to vector<8x8xbf16>
    %cst_53 = arith.constant dense<0.000000e+00> : vector<8x8xf32>
    %88 = tpu.matmul %85, %86, %cst_53 {dimension_numbers = #tpu.dot_dimension_numbers<[1], [1], [0], [0], [0, 0, 1, 0], [], []>} : vector<8x8xbf16>, vector<8x8xbf16>, vector<8x8xf32> -> vector<8x8xf32>
    %cst_54 = arith.constant 0.353553385 : f32
    %89 = vector.broadcast %cst_54 : f32 to vector<8x8xf32>
    %90 = arith.mulf %88, %89 : vector<8x8xf32>
    %c2 = arith.constant 2 : index
    %c0_55 = arith.constant 0 : index
    %c0_56 = arith.constant 0 : index
    %91 = vector.load %arg6[%c2, %c0_55, %c0_56] : memref<4x8x1xf32, #tpu.memory_space<vmem>>, vector<1x8x1xf32>
    %92 = vector.shape_cast %91 : vector<1x8x1xf32> to vector<8x1xf32>
    %cst_57 = arith.constant dense<0xFF800000> : vector<8xf32>
    %93 = vector.multi_reduction <maximumf>, %90, %cst_57 [1] : vector<8x8xf32> to vector<8xf32>
    %94 = vector.shape_cast %93 : vector<8xf32> to vector<8x1xf32>
    %95 = arith.maximumf %92, %94 : vector<8x1xf32>
    %96 = arith.subf %92, %95 : vector<8x1xf32>
    %97 = math.exp %96 : vector<8x1xf32>
    %98 = vector.broadcast %95 : vector<8x1xf32> to vector<8x8xf32>
    %99 = arith.subf %90, %98 : vector<8x8xf32>
    %100 = math.exp %99 : vector<8x8xf32>
    %c2_58 = arith.constant 2 : index
    %c0_59 = arith.constant 0 : index
    %c0_60 = arith.constant 0 : index
    %101 = vector.load %arg7[%c2_58, %c0_59, %c0_60] : memref<4x8x1xf32, #tpu.memory_space<vmem>>, vector<1x8x1xf32>
    %102 = vector.shape_cast %101 : vector<1x8x1xf32> to vector<8x1xf32>
    %103 = arith.mulf %97, %102 : vector<8x1xf32>
    %cst_61 = arith.constant dense<0.000000e+00> : vector<8xf32>
    %104 = vector.multi_reduction <add>, %100, %cst_61 [1] : vector<8x8xf32> to vector<8xf32>
    %105 = vector.shape_cast %104 : vector<8xf32> to vector<8x1xf32>
    %106 = arith.addf %103, %105 : vector<8x1xf32>
    %c2_62 = arith.constant 2 : index
    %c0_63 = arith.constant 0 : index
    %c0_64 = arith.constant 0 : index
    %107 = vector.load %arg7[%c2_62, %c0_63, %c0_64] : memref<4x8x1xf32, #tpu.memory_space<vmem>>, vector<1x8x1xf32>
    %108 = vector.shape_cast %107 : vector<1x8x1xf32> to vector<8x1xf32>
    %109 = vector.shape_cast %106 : vector<8x1xf32> to vector<1x8x1xf32>
    tpu.vector_store %arg7[%c2_62, %c0_63, %c0_64], %109 {strides = array<i32>} : memref<4x8x1xf32, #tpu.memory_space<vmem>>, vector<1x8x1xf32>,
    %c2_65 = arith.constant 2 : index
    %c0_66 = arith.constant 0 : index
    %c0_67 = arith.constant 0 : index
    %110 = vector.load %arg8[%c2_65, %c0_66, %c0_67] : memref<4x8x8xf32, #tpu.memory_space<vmem>>, vector<1x8x8xf32>
    %111 = vector.shape_cast %110 : vector<1x8x8xf32> to vector<8x8xf32>
    %112 = vector.broadcast %97 : vector<8x1xf32> to vector<8x8xf32>
    %113 = arith.mulf %112, %111 : vector<8x8xf32>
    %114 = arith.truncf %100 : vector<8x8xf32> to vector<8x8xbf16>
    %cst_68 = arith.constant dense<0.000000e+00> : vector<8x8xf32>
    %115 = tpu.matmul %114, %87, %cst_68 {dimension_numbers = #tpu.dot_dimension_numbers<[1], [0], [0], [1], [0, 0, 1, 1], [], []>} : vector<8x8xbf16>, vector<8x8xbf16>, vector<8x8xf32> -> vector<8x8xf32>
    %116 = arith.addf %113, %115 : vector<8x8xf32>
    %c2_69 = arith.constant 2 : index
    %c0_70 = arith.constant 0 : index
    %c0_71 = arith.constant 0 : index
    %117 = vector.load %arg8[%c2_69, %c0_70, %c0_71] : memref<4x8x8xf32, #tpu.memory_space<vmem>>, vector<1x8x8xf32>
    %118 = vector.shape_cast %117 : vector<1x8x8xf32> to vector<8x8xf32>
    %119 = vector.shape_cast %116 : vector<8x8xf32> to vector<1x8x8xf32>
    tpu.vector_store %arg8[%c2_69, %c0_70, %c0_71], %119 {strides = array<i32>} : memref<4x8x8xf32, #tpu.memory_space<vmem>>, vector<1x8x8xf32>,
    %c2_72 = arith.constant 2 : index
    %c0_73 = arith.constant 0 : index
    %c0_74 = arith.constant 0 : index
    %120 = vector.load %arg6[%c2_72, %c0_73, %c0_74] : memref<4x8x1xf32, #tpu.memory_space<vmem>>, vector<1x8x1xf32>
    %121 = vector.shape_cast %120 : vector<1x8x1xf32> to vector<8x1xf32>
    %122 = vector.shape_cast %95 : vector<8x1xf32> to vector<1x8x1xf32>
    tpu.vector_store %arg6[%c2_72, %c0_73, %c0_74], %122 {strides = array<i32>} : memref<4x8x1xf32, #tpu.memory_space<vmem>>, vector<1x8x1xf32>,
    %123 = vector.extract_strided_slice %4 {offsets = [0, 24], sizes = [8, 8], strides = [1, 1]} : vector<8x32xbf16> to vector<8x8xbf16>
    %124 = vector.extract_strided_slice %6 {offsets = [0, 24], sizes = [8, 8], strides = [1, 1]} : vector<8x32xbf16> to vector<8x8xbf16>
    %125 = vector.extract_strided_slice %8 {offsets = [0, 24], sizes = [8, 8], strides = [1, 1]} : vector<8x32xbf16> to vector<8x8xbf16>
    %cst_75 = arith.constant dense<0.000000e+00> : vector<8x8xf32>
    %126 = tpu.matmul %123, %124, %cst_75 {dimension_numbers = #tpu.dot_dimension_numbers<[1], [1], [0], [0], [0, 0, 1, 0], [], []>} : vector<8x8xbf16>, vector<8x8xbf16>, vector<8x8xf32> -> vector<8x8xf32>
    %cst_76 = arith.constant 0.353553385 : f32
    %127 = vector.broadcast %cst_76 : f32 to vector<8x8xf32>
    %128 = arith.mulf %126, %127 : vector<8x8xf32>
    %c3 = arith.constant 3 : index
    %c0_77 = arith.constant 0 : index
    %c0_78 = arith.constant 0 : index
    %129 = vector.load %arg6[%c3, %c0_77, %c0_78] : memref<4x8x1xf32, #tpu.memory_space<vmem>>, vector<1x8x1xf32>
    %130 = vector.shape_cast %129 : vector<1x8x1xf32> to vector<8x1xf32>
    %cst_79 = arith.constant dense<0xFF800000> : vector<8xf32>
    %131 = vector.multi_reduction <maximumf>, %128, %cst_79 [1] : vector<8x8xf32> to vector<8xf32>
    %132 = vector.shape_cast %131 : vector<8xf32> to vector<8x1xf32>
    %133 = arith.maximumf %130, %132 : vector<8x1xf32>
    %134 = arith.subf %130, %133 : vector<8x1xf32>
    %135 = math.exp %134 : vector<8x1xf32>
    %136 = vector.broadcast %133 : vector<8x1xf32> to vector<8x8xf32>
    %137 = arith.subf %128, %136 : vector<8x8xf32>
    %138 = math.exp %137 : vector<8x8xf32>
    %c3_80 = arith.constant 3 : index
    %c0_81 = arith.constant 0 : index
    %c0_82 = arith.constant 0 : index
    %139 = vector.load %arg7[%c3_80, %c0_81, %c0_82] : memref<4x8x1xf32, #tpu.memory_space<vmem>>, vector<1x8x1xf32>
    %140 = vector.shape_cast %139 : vector<1x8x1xf32> to vector<8x1xf32>
    %141 = arith.mulf %135, %140 : vector<8x1xf32>
    %cst_83 = arith.constant dense<0.000000e+00> : vector<8xf32>
    %142 = vector.multi_reduction <add>, %138, %cst_83 [1] : vector<8x8xf32> to vector<8xf32>
    %143 = vector.shape_cast %142 : vector<8xf32> to vector<8x1xf32>
    %144 = arith.addf %141, %143 : vector<8x1xf32>
    %c3_84 = arith.constant 3 : index
    %c0_85 = arith.constant 0 : index
    %c0_86 = arith.constant 0 : index
    %145 = vector.load %arg7[%c3_84, %c0_85, %c0_86] : memref<4x8x1xf32, #tpu.memory_space<vmem>>, vector<1x8x1xf32>
    %146 = vector.shape_cast %145 : vector<1x8x1xf32> to vector<8x1xf32>
    %147 = vector.shape_cast %144 : vector<8x1xf32> to vector<1x8x1xf32>
    tpu.vector_store %arg7[%c3_84, %c0_85, %c0_86], %147 {strides = array<i32>} : memref<4x8x1xf32, #tpu.memory_space<vmem>>, vector<1x8x1xf32>,
    %c3_87 = arith.constant 3 : index
    %c0_88 = arith.constant 0 : index
    %c0_89 = arith.constant 0 : index
    %148 = vector.load %arg8[%c3_87, %c0_88, %c0_89] : memref<4x8x8xf32, #tpu.memory_space<vmem>>, vector<1x8x8xf32>
    %149 = vector.shape_cast %148 : vector<1x8x8xf32> to vector<8x8xf32>
    %150 = vector.broadcast %135 : vector<8x1xf32> to vector<8x8xf32>
    %151 = arith.mulf %150, %149 : vector<8x8xf32>
    %152 = arith.truncf %138 : vector<8x8xf32> to vector<8x8xbf16>
    %cst_90 = arith.constant dense<0.000000e+00> : vector<8x8xf32>
    %153 = tpu.matmul %152, %125, %cst_90 {dimension_numbers = #tpu.dot_dimension_numbers<[1], [0], [0], [1], [0, 0, 1, 1], [], []>} : vector<8x8xbf16>, vector<8x8xbf16>, vector<8x8xf32> -> vector<8x8xf32>
    %154 = arith.addf %151, %153 : vector<8x8xf32>
    %c3_91 = arith.constant 3 : index
    %c0_92 = arith.constant 0 : index
    %c0_93 = arith.constant 0 : index
    %155 = vector.load %arg8[%c3_91, %c0_92, %c0_93] : memref<4x8x8xf32, #tpu.memory_space<vmem>>, vector<1x8x8xf32>
    %156 = vector.shape_cast %155 : vector<1x8x8xf32> to vector<8x8xf32>
    %157 = vector.shape_cast %154 : vector<8x8xf32> to vector<1x8x8xf32>
    tpu.vector_store %arg8[%c3_91, %c0_92, %c0_93], %157 {strides = array<i32>} : memref<4x8x8xf32, #tpu.memory_space<vmem>>, vector<1x8x8xf32>,
    %c3_94 = arith.constant 3 : index
    %c0_95 = arith.constant 0 : index
    %c0_96 = arith.constant 0 : index
    %158 = vector.load %arg6[%c3_94, %c0_95, %c0_96] : memref<4x8x1xf32, #tpu.memory_space<vmem>>, vector<1x8x1xf32>
    %159 = vector.shape_cast %158 : vector<1x8x1xf32> to vector<8x1xf32>
    %160 = vector.shape_cast %133 : vector<8x1xf32> to vector<1x8x1xf32>
    tpu.vector_store %arg6[%c3_94, %c0_95, %c0_96], %160 {strides = array<i32>} : memref<4x8x1xf32, #tpu.memory_space<vmem>>, vector<1x8x1xf32>,
    %c0_i32_97 = arith.constant 0 : i32
    %161 = arith.cmpi eq, %arg1, %c0_i32_97 : i32
    %162 = arith.extui %161 : i1 to i32
    %c0_i32_98 = arith.constant 0 : i32
    %163 = arith.cmpi ne, %162, %c0_i32_98 : i32
    scf.if %163 {
      %c0_99 = arith.constant 0 : index
      %c0_100 = arith.constant 0 : index
      %c0_101 = arith.constant 0 : index
      %164 = vector.load %arg7[%c0_99, %c0_100, %c0_101] : memref<4x8x1xf32, #tpu.memory_space<vmem>>, vector<1x8x1xf32>
      %165 = vector.shape_cast %164 : vector<1x8x1xf32> to vector<8x1xf32>
      %166 = tpu.reciprocal %165 {approx = true} : vector<8x1xf32> -> vector<8x1xf32>
      %c0_102 = arith.constant 0 : index
      %c0_103 = arith.constant 0 : index
      %c0_104 = arith.constant 0 : index
      %167 = vector.load %arg8[%c0_102, %c0_103, %c0_104] : memref<4x8x8xf32, #tpu.memory_space<vmem>>, vector<1x8x8xf32>
      %168 = vector.shape_cast %167 : vector<1x8x8xf32> to vector<8x8xf32>
      %169 = vector.broadcast %166 : vector<8x1xf32> to vector<8x8xf32>
      %170 = arith.mulf %168, %169 : vector<8x8xf32>
      %171 = arith.truncf %170 : vector<8x8xf32> to vector<8x8xbf16>
      %c0_105 = arith.constant 0 : index
      %c0_106 = arith.constant 0 : index
      %c0_107 = arith.constant 0 : index
      %172 = vector.load %arg5[%c0_105, %c0_106, %c0_107] : memref<1x8x32xbf16, #tpu.memory_space<vmem>>, vector<1x8x8xbf16>
      %173 = vector.shape_cast %172 : vector<1x8x8xbf16> to vector<8x8xbf16>
      %174 = vector.shape_cast %171 : vector<8x8xbf16> to vector<1x8x8xbf16>
      tpu.vector_store %arg5[%c0_105, %c0_106, %c0_107], %174 {strides = array<i32>} : memref<1x8x32xbf16, #tpu.memory_space<vmem>>, vector<1x8x8xbf16>,
      %c1_108 = arith.constant 1 : index
      %c0_109 = arith.constant 0 : index
      %c0_110 = arith.constant 0 : index
      %175 = vector.load %arg7[%c1_108, %c0_109, %c0_110] : memref<4x8x1xf32, #tpu.memory_space<vmem>>, vector<1x8x1xf32>
      %176 = vector.shape_cast %175 : vector<1x8x1xf32> to vector<8x1xf32>
      %177 = tpu.reciprocal %176 {approx = true} : vector<8x1xf32> -> vector<8x1xf32>
      %c1_111 = arith.constant 1 : index
      %c0_112 = arith.constant 0 : index
      %c0_113 = arith.constant 0 : index
      %178 = vector.load %arg8[%c1_111, %c0_112, %c0_113] : memref<4x8x8xf32, #tpu.memory_space<vmem>>, vector<1x8x8xf32>
      %179 = vector.shape_cast %178 : vector<1x8x8xf32> to vector<8x8xf32>
      %180 = vector.broadcast %177 : vector<8x1xf32> to vector<8x8xf32>
      %181 = arith.mulf %179, %180 : vector<8x8xf32>
      %182 = arith.truncf %181 : vector<8x8xf32> to vector<8x8xbf16>
      %c0_114 = arith.constant 0 : index
      %c0_115 = arith.constant 0 : index
      %c8 = arith.constant 8 : index
      %183 = vector.load %arg5[%c0_114, %c0_115, %c8] : memref<1x8x32xbf16, #tpu.memory_space<vmem>>, vector<1x8x8xbf16>
      %184 = vector.shape_cast %183 : vector<1x8x8xbf16> to vector<8x8xbf16>
      %185 = vector.shape_cast %182 : vector<8x8xbf16> to vector<1x8x8xbf16>
      tpu.vector_store %arg5[%c0_114, %c0_115, %c8], %185 {strides = array<i32>} : memref<1x8x32xbf16, #tpu.memory_space<vmem>>, vector<1x8x8xbf16>,
      %c2_116 = arith.constant 2 : index
      %c0_117 = arith.constant 0 : index
      %c0_118 = arith.constant 0 : index
      %186 = vector.load %arg7[%c2_116, %c0_117, %c0_118] : memref<4x8x1xf32, #tpu.memory_space<vmem>>, vector<1x8x1xf32>
      %187 = vector.shape_cast %186 : vector<1x8x1xf32> to vector<8x1xf32>
      %188 = tpu.reciprocal %187 {approx = true} : vector<8x1xf32> -> vector<8x1xf32>
      %c2_119 = arith.constant 2 : index
      %c0_120 = arith.constant 0 : index
      %c0_121 = arith.constant 0 : index
      %189 = vector.load %arg8[%c2_119, %c0_120, %c0_121] : memref<4x8x8xf32, #tpu.memory_space<vmem>>, vector<1x8x8xf32>
      %190 = vector.shape_cast %189 : vector<1x8x8xf32> to vector<8x8xf32>
      %191 = vector.broadcast %188 : vector<8x1xf32> to vector<8x8xf32>
      %192 = arith.mulf %190, %191 : vector<8x8xf32>
      %193 = arith.truncf %192 : vector<8x8xf32> to vector<8x8xbf16>
      %c0_122 = arith.constant 0 : index
      %c0_123 = arith.constant 0 : index
      %c16 = arith.constant 16 : index
      %194 = vector.load %arg5[%c0_122, %c0_123, %c16] : memref<1x8x32xbf16, #tpu.memory_space<vmem>>, vector<1x8x8xbf16>
      %195 = vector.shape_cast %194 : vector<1x8x8xbf16> to vector<8x8xbf16>
      %196 = vector.shape_cast %193 : vector<8x8xbf16> to vector<1x8x8xbf16>
      tpu.vector_store %arg5[%c0_122, %c0_123, %c16], %196 {strides = array<i32>} : memref<1x8x32xbf16, #tpu.memory_space<vmem>>, vector<1x8x8xbf16>,
      %c3_124 = arith.constant 3 : index
      %c0_125 = arith.constant 0 : index
      %c0_126 = arith.constant 0 : index
      %197 = vector.load %arg7[%c3_124, %c0_125, %c0_126] : memref<4x8x1xf32, #tpu.memory_space<vmem>>, vector<1x8x1xf32>
      %198 = vector.shape_cast %197 : vector<1x8x1xf32> to vector<8x1xf32>
      %199 = tpu.reciprocal %198 {approx = true} : vector<8x1xf32> -> vector<8x1xf32>
      %c3_127 = arith.constant 3 : index
      %c0_128 = arith.constant 0 : index
      %c0_129 = arith.constant 0 : index
      %200 = vector.load %arg8[%c3_127, %c0_128, %c0_129] : memref<4x8x8xf32, #tpu.memory_space<vmem>>, vector<1x8x8xf32>
      %201 = vector.shape_cast %200 : vector<1x8x8xf32> to vector<8x8xf32>
      %202 = vector.broadcast %199 : vector<8x1xf32> to vector<8x8xf32>
      %203 = arith.mulf %201, %202 : vector<8x8xf32>
      %204 = arith.truncf %203 : vector<8x8xf32> to vector<8x8xbf16>
      %c0_130 = arith.constant 0 : index
      %c0_131 = arith.constant 0 : index
      %c24 = arith.constant 24 : index
      %205 = vector.load %arg5[%c0_130, %c0_131, %c24] : memref<1x8x32xbf16, #tpu.memory_space<vmem>>, vector<1x8x8xbf16>
      %206 = vector.shape_cast %205 : vector<1x8x8xbf16> to vector<8x8xbf16>
      %207 = vector.shape_cast %204 : vector<8x8xbf16> to vector<1x8x8xbf16>
      tpu.vector_store %arg5[%c0_130, %c0_131, %c24], %207 {strides = array<i32>} : memref<1x8x32xbf16, #tpu.memory_space<vmem>>, vector<1x8x8xbf16>,
    } else {
    }
    return
  }
  func.func @transform_0(%arg0: i32, %arg1: i32) -> (i32, i32, i32) {
    %c0_i32 = arith.constant 0 : i32
    %c0_i32_0 = arith.constant 0 : i32
    %c0_i32_1 = arith.constant 0 : i32
    return %arg0, %c0_i32, %c0_i32_0 : i32, i32, i32
  }
  func.func @transform_1(%arg0: i32, %arg1: i32) -> (i32, i32, i32) {
    %c0_i32 = arith.constant 0 : i32
    %c0_i32_0 = arith.constant 0 : i32
    return %arg0, %arg1, %c0_i32 : i32, i32, i32
  }
  func.func @transform_2(%arg0: i32, %arg1: i32) -> (i32, i32, i32) {
    %c0_i32 = arith.constant 0 : i32
    %c0_i32_0 = arith.constant 0 : i32
    return %arg0, %arg1, %c0_i32 : i32, i32, i32
  }
  func.func @transform_3(%arg0: i32, %arg1: i32) -> (i32, i32, i32) {
    %c0_i32 = arith.constant 0 : i32
    %c0_i32_0 = arith.constant 0 : i32
    %c0_i32_1 = arith.constant 0 : i32
    return %arg0, %c0_i32, %c0_i32_0 : i32, i32, i32
  }
}

</mosaic_0001>

<llo_original>
// kernel: tokenformer_forward.9
$region0: #{tokenformer_forward.9}
  #allocation0 [shape = 'u32[]', space=smem, size = 0x4, offset = 0x4, fixed_abs, tag = 'smem constant byte address 0x4 - core index']
  #allocation1 [shape = 'u32[144,128]{1,0:T(1,128)}', space=vmem, size = 0x12000, scoped, tag = 'internal scratch']
  %s0 = inlined_call_operand.vmem [shape: bf16[16,32], index: 0, kind: input, shape index: {}]
  %s1 = inlined_call_operand.vmem [shape: bf16[64,32], index: 1, kind: input, shape index: {}]
  %s2 = inlined_call_operand.vmem [shape: f32[1,64], index: 2, kind: input, shape index: {}]
  %s3 = inlined_call_operand.hbm [shape: f32[16,64], index: 3, kind: output, shape index: {}]
  %s4 = sld [smem:[#allocation0]]
  $region22: #{tokenformer_forward.9} parent=0
    _
  %s6 = ssub.s32 1, %s4
  %s7 = scalar_select 0, %s6, %s4
  $region1: #{tokenformer_forward.9} parent=0
    #allocation2 [shape = 'u8[8192]{0}', space=vmem, size = 0x2000, scoped, tag = 'output window, operand 0, single buffered']
    #allocation3 [shape = 's32[1]{0}', space=sflag, size = 0x4, scoped, tag = 'scoped memory for tokenformer_forward.9']
    %8 = vsyncpa [#allocation3], 0
    // Predicated region
    $region2: #{tokenformer_forward.9} parent=1 // pred_check
      _
    $region3: #{tokenformer_forward.9} parent=1 // pred_check_branch
      %10 = sbr.rel (0) target = $region5
    $region4: #{tokenformer_forward.9} parent=1 // pred_region
      _
    $region5: #{tokenformer_forward.9} parent=1 // pred_fallthru
      _
    // Predicated region
    $region6: #{tokenformer_forward.9} parent=1 // pred_check
      _
    $region7: #{tokenformer_forward.9} parent=1 // pred_check_branch
      %12 = sbr.rel (0) target = $region9
    $region8: #{tokenformer_forward.9} parent=1 // pred_region
      _
    $region9: #{tokenformer_forward.9} parent=1 // pred_fallthru
      _
    // Predicated region
    $region10: #{tokenformer_forward.9} parent=1 // pred_check
      _
    $region11: #{tokenformer_forward.9} parent=1 // pred_check_branch
      %14 = sbr.rel (0) target = $region13
    $region12: #{tokenformer_forward.9} parent=1 // pred_region
      _
    $region13: #{tokenformer_forward.9} parent=1 // pred_fallthru
      _
    %v16 = vld [vmem:[%s0] sm:$0xf]
    %v17 = vld [vmem:[%s0 + $0x4] sm:$0xf]
    %v18 = vld [vmem:[%s1] sm:$0xf]
    %v19 = vld [vmem:[%s1 + $0x4] sm:$0xf]
    %v20 = vld [vmem:[%s1 + $0x8] sm:$0xf]
    %v21 = vld [vmem:[%s1 + $0xc] sm:$0xf]
    %v22 = vld [vmem:[%s1 + $0x10] sm:$0xf]
    %v23 = vld [vmem:[%s1 + $0x14] sm:$0xf]
    %v24 = vld [vmem:[%s1 + $0x18] sm:$0xf]
    %v25 = vld [vmem:[%s1 + $0x1c] sm:$0xf]
    %v26 = vld [vmem:[%s2] sm:$0x1]
    %v28 = vlaneseq
    %v29 = vshrl.u32 %v28, 7
    %v30 = vsub.s32 0, %v29
    %v31 = vrot.slane %v26, %v30
    %v35 = vunpack.c.l.b16 %v16
    %v36 = vunpack.c.l.b16 %v17
    %v37 = vpack.c.b16 %v36, %v35
    %v46 = vunpack.c.l.b16 %v18
    %v47 = vunpack.c.l.b16 %v19
    %v48 = vunpack.c.l.b16 %v20
    %v49 = vunpack.c.l.b16 %v21
    %v50 = vunpack.c.l.b16 %v22
    %v51 = vunpack.c.l.b16 %v23
    %v52 = vunpack.c.l.b16 %v24
    %v53 = vunpack.c.l.b16 %v25
    %v54 = vpack.c.b16 %v47, %v46
    %v55 = vpack.c.b16 %v49, %v48
    %v56 = vpack.c.b16 %v51, %v50
    %v57 = vpack.c.b16 %v53, %v52
    %vm58 = vcmask 261120
    %v60 = vsel %vm58, %v37, 0
    %v63 = vsel %vm58, %v54, 0
    %v66 = vsel %vm58, %v55, 0
    %v69 = vsel %vm58, %v56, 0
    %v72 = vsel %vm58, %v57, 0
    %74 = vmatprep.subr.bf16.mxu0 0
    %75 = vmatpush1.bf16.xpose.msra.mxu0 %v63
    %76 = vmatprep.subr.bf16.mxu0 0
    %77 = vmatpush1.bf16.xpose.msra.mxu0 %v66
    %78 = vmatprep.subr.bf16.mxu0 0
    %79 = vmatpush1.bf16.xpose.msra.mxu0 %v69
    %80 = vmatprep.subr.bf16.mxu0 0
    %81 = vmatpush1.bf16.xpose.msra.mxu0 %v72
    %82 = vmatprep.subr.bf16.mxu0 0
    %83 = vmatpush1.bf16.xpose.msra.mxu0 0
    %84 = vmatprep.subr.bf16.mxu0 0
    %85 = vmatpush1.bf16.xpose.msra.mxu0 0
    %86 = vmatprep.subr.bf16.mxu0 0
    %87 = vmatpush1.bf16.xpose.msra.mxu0 0
    %88 = vmatprep.subr.bf16.mxu0 0
    %89 = vmatpush1.bf16.xpose.msra.mxu0 0
    %90 = vmatprep.subr.bf16.mxu0 0
    %91 = vmatpush1.bf16.xpose.msra.mxu0 0
    %92 = vmatprep.subr.bf16.mxu0 0
    %93 = vmatpush1.bf16.xpose.msra.mxu0 0
    %94 = vmatprep.subr.bf16.mxu0 0
    %95 = vmatpush1.bf16.xpose.msra.mxu0 0
    %96 = vmatprep.subr.bf16.mxu0 0
    %97 = vmatpush1.bf16.xpose.msra.mxu0 0
    %98 = vmatprep.subr.bf16.mxu0 0
    %99 = vmatpush1.bf16.xpose.msra.mxu0 0
    %100 = vmatprep.subr.bf16.mxu0 0
    %101 = vmatpush1.bf16.xpose.msra.mxu0 0
    %102 = vmatprep.subr.bf16.mxu0 0
    %103 = vmatpush1.bf16.xpose.msra.mxu0 0
    %104 = vmatprep.subr.bf16.mxu0 0
    %105 = vmatpush1.bf16.xpose.msra.mxu0 0
    %106 = vmatprep.mubr.bf16.mxu0 0
    %107 = vmatmul.mubr.bf16.gmra.mrb[0].mxu0 %v60
    %v108 = vpop.f32.mrb[0].mxu0
    %v109 = vadd.f32 %v31, %v108
    %v110 = vpop.f32.mrb[0].mxu0
    %v111 = vpop.f32.mrb[0].mxu0
    %v112 = vadd.f32 %v31, %v111
    %v113 = vpop.f32.mrb[0].mxu0
    %114 = vdwg.mxu0
    %vm115 = vcmask 523264
    %116 = vst.msk [vmem:[#allocation2] sm:$0xff] %vm115, %v109
    %117 = vst.msk [vmem:[#allocation2 + $0x8] sm:$0xff] %vm115, %v112
    // Predicated region
    $region14: #{tokenformer_forward.9} parent=1 // pred_check
      _
    $region15: #{tokenformer_forward.9} parent=1 // pred_check_branch
      %119 = sbr.rel (0) target = $region17
    $region16: #{tokenformer_forward.9} parent=1 // pred_region
      %s121 = ssub.s32 256, 256
      %122 = vsyncadd [#allocation3], %s121
      %s123 = sshll.u32 [#allocation2], 4
      %s124 = int_to_ptr.vmem [resolvable:$true] %s123
      %129 = dma.vmem_to_hbm [thread:$0]  %s124, 256, %s3, [#allocation3], 128, 128, 8
    $region17: #{tokenformer_forward.9} parent=1 // pred_fallthru
      _
    // Predicated region
    $region18: #{tokenformer_forward.9} parent=1 // pred_check
      _
    $region19: #{tokenformer_forward.9} parent=1 // pred_check_branch
      %131 = sbr.rel (0) target = $region21
    $region20: #{tokenformer_forward.9} parent=1 // pred_region
      %132 = dma.done [#allocation3], 256
    $region21: #{tokenformer_forward.9} parent=1 // pred_fallthru
      _
    %133 = vsyncpa [#allocation3], 1

// kernel: tokenformer_forward.7
$region0: #{tokenformer_forward.7}
  #allocation0 [shape = 'u32[]', space=smem, size = 0x4, offset = 0x4, fixed_abs, tag = 'smem constant byte address 0x4 - core index']
  #allocation1 [shape = 'u32[144,128]{1,0:T(1,128)}', space=vmem, size = 0x12000, scoped, tag = 'internal scratch']
  %s0 = inlined_call_operand.vmem [shape: bf16[16,32], index: 0, kind: input, shape index: {}]
  %s1 = inlined_call_operand.vmem [shape: bf16[128,32], index: 1, kind: input, shape index: {}]
  %s2 = inlined_call_operand.vmem [shape: bf16[128,32], index: 2, kind: input, shape index: {}]
  %s3 = inlined_call_operand.vmem [shape: bf16[16,32], index: 3, kind: output, shape index: {}]
  %s4 = sld [smem:[#allocation0]]
  $region22: #{tokenformer_forward.7} parent=0
    _
  %s6 = ssub.s32 1, %s4
  %s7 = scalar_select 0, %s6, %s4
  // Predicated region
  $region2: #{tokenformer_forward.7} parent=0 // pred_check
    _
  $region3: #{tokenformer_forward.7} parent=0 // pred_check_branch
    %9 = sbr.rel (0) target = $region5
  $region4: #{tokenformer_forward.7} parent=0 // pred_region
    _
  $region5: #{tokenformer_forward.7} parent=0 // pred_fallthru
    _
  // Predicated region
  $region6: #{tokenformer_forward.7} parent=0 // pred_check
    _
  $region7: #{tokenformer_forward.7} parent=0 // pred_check_branch
    %11 = sbr.rel (0) target = $region9
  $region8: #{tokenformer_forward.7} parent=0 // pred_region
    _
  $region9: #{tokenformer_forward.7} parent=0 // pred_fallthru
    _
  // Predicated region
  $region10: #{tokenformer_forward.7} parent=0 // pred_check
    _
  $region11: #{tokenformer_forward.7} parent=0 // pred_check_branch
    %13 = sbr.rel (0) target = $region13
  $region12: #{tokenformer_forward.7} parent=0 // pred_region
    _
  $region13: #{tokenformer_forward.7} parent=0 // pred_fallthru
    _
  %v15 = vld [vmem:[%s0] sm:$0xf]
  %v16 = vld [vmem:[%s0 + $0x4] sm:$0xf]
  %v17 = vld [vmem:[%s1] sm:$0xf]
  %v18 = vld [vmem:[%s1 + $0x4] sm:$0xf]
  %v19 = vld [vmem:[%s1 + $0x8] sm:$0xf]
  %v20 = vld [vmem:[%s1 + $0xc] sm:$0xf]
  %v21 = vld [vmem:[%s1 + $0x10] sm:$0xf]
  %v22 = vld [vmem:[%s1 + $0x14] sm:$0xf]
  %v23 = vld [vmem:[%s1 + $0x18] sm:$0xf]
  %v24 = vld [vmem:[%s1 + $0x1c] sm:$0xf]
  %v25 = vld [vmem:[%s1 + $0x20] sm:$0xf]
  %v26 = vld [vmem:[%s1 + $0x24] sm:$0xf]
  %v27 = vld [vmem:[%s1 + $0x28] sm:$0xf]
  %v28 = vld [vmem:[%s1 + $0x2c] sm:$0xf]
  %v29 = vld [vmem:[%s1 + $0x30] sm:$0xf]
  %v30 = vld [vmem:[%s1 + $0x34] sm:$0xf]
  %v31 = vld [vmem:[%s1 + $0x38] sm:$0xf]
  %v32 = vld [vmem:[%s1 + $0x3c] sm:$0xf]
  %v35 = vunpack.c.l.b16 %v15
  %v36 = vunpack.c.l.b16 %v16
  %v37 = vpack.c.b16 %v36, %v35
  %v54 = vunpack.c.l.b16 %v17
  %v55 = vunpack.c.l.b16 %v18
  %v56 = vunpack.c.l.b16 %v19
  %v57 = vunpack.c.l.b16 %v20
  %v58 = vunpack.c.l.b16 %v21
  %v59 = vunpack.c.l.b16 %v22
  %v60 = vunpack.c.l.b16 %v23
  %v61 = vunpack.c.l.b16 %v24
  %v62 = vunpack.c.l.b16 %v25
  %v63 = vunpack.c.l.b16 %v26
  %v64 = vunpack.c.l.b16 %v27
  %v65 = vunpack.c.l.b16 %v28
  %v66 = vunpack.c.l.b16 %v29
  %v67 = vunpack.c.l.b16 %v30
  %v68 = vunpack.c.l.b16 %v31
  %v69 = vunpack.c.l.b16 %v32
  %v70 = vpack.c.b16 %v55, %v54
  %v71 = vpack.c.b16 %v57, %v56
  %v72 = vpack.c.b16 %v59, %v58
  %v73 = vpack.c.b16 %v61, %v60
  %v74 = vpack.c.b16 %v63, %v62
  %v75 = vpack.c.b16 %v65, %v64
  %v76 = vpack.c.b16 %v67, %v66
  %v77 = vpack.c.b16 %v69, %v68
  %vm78 = vcmask 261120
  %v80 = vsel %vm78, %v37, 0
  %v83 = vsel %vm78, %v70, 0
  %v86 = vsel %vm78, %v71, 0
  %v89 = vsel %vm78, %v72, 0
  %v92 = vsel %vm78, %v73, 0
  %v95 = vsel %vm78, %v74, 0
  %v98 = vsel %vm78, %v75, 0
  %v101 = vsel %vm78, %v76, 0
  %v104 = vsel %vm78, %v77, 0
  %106 = vmatprep.subr.bf16.mxu0 0
  %107 = vmatpush1.bf16.xpose.msra.mxu0 %v83
  %108 = vmatprep.subr.bf16.mxu0 0
  %109 = vmatpush1.bf16.xpose.msra.mxu0 %v86
  %110 = vmatprep.subr.bf16.mxu0 0
  %111 = vmatpush1.bf16.xpose.msra.mxu0 %v89
  %112 = vmatprep.subr.bf16.mxu0 0
  %113 = vmatpush1.bf16.xpose.msra.mxu0 %v92
  %114 = vmatprep.subr.bf16.mxu0 0
  %115 = vmatpush1.bf16.xpose.msra.mxu0 %v95
  %116 = vmatprep.subr.bf16.mxu0 0
  %117 = vmatpush1.bf16.xpose.msra.mxu0 %v98
  %118 = vmatprep.subr.bf16.mxu0 0
  %119 = vmatpush1.bf16.xpose.msra.mxu0 %v101
  %120 = vmatprep.subr.bf16.mxu0 0
  %121 = vmatpush1.bf16.xpose.msra.mxu0 %v104
  %122 = vmatprep.subr.bf16.mxu0 0
  %123 = vmatpush1.bf16.xpose.msra.mxu0 0
  %124 = vmatprep.subr.bf16.mxu0 0
  %125 = vmatpush1.bf16.xpose.msra.mxu0 0
  %126 = vmatprep.subr.bf16.mxu0 0
  %127 = vmatpush1.bf16.xpose.msra.mxu0 0
  %128 = vmatprep.subr.bf16.mxu0 0
  %129 = vmatpush1.bf16.xpose.msra.mxu0 0
  %130 = vmatprep.subr.bf16.mxu0 0
  %131 = vmatpush1.bf16.xpose.msra.mxu0 0
  %132 = vmatprep.subr.bf16.mxu0 0
  %133 = vmatpush1.bf16.xpose.msra.mxu0 0
  %134 = vmatprep.subr.bf16.mxu0 0
  %135 = vmatpush1.bf16.xpose.msra.mxu0 0
  %136 = vmatprep.subr.bf16.mxu0 0
  %137 = vmatpush1.bf16.xpose.msra.mxu0 0
  %138 = vmatprep.mubr.bf16.mxu0 0
  %139 = vmatmul.mubr.bf16.gmra.mrb[0].mxu0 %v80
  %v140 = vpop.f32.mrb[0].mxu0
  %v141 = vadd.f32 0.0, %v140
  %v142 = vpop.f32.mrb[0].mxu0
  %v143 = vpop.f32.mrb[0].mxu0
  %v144 = vadd.f32 0.0, %v143
  %v145 = vpop.f32.mrb[0].mxu0
  %146 = vdwg.mxu0
  %v147 = vmul.f32 %v141, 0.17677669
  %v148 = vmul.f32 %v144, 0.17677669
  %v149 = vmul.f32 %v147, %v147
  %v150 = vmul.f32 %v148, %v148
  %151 = vadd.xlane.f32.xlu0 %v149
  %v152 = vpop.xlane.xlu0 %151
  %153 = vadd.xlane.f32.xlu0 %v150
  %v154 = vpop.xlane.xlu0 %153
  %v155 = vadd.f32 %v152, 1e-12
  %v156 = vadd.f32 %v154, 1e-12
  %v157 = vrsqrt.pop %v155
  %v158 = vrsqrt.pop %v156
  %v159 = vmul.f32 %v157, 3.1622777
  %v160 = vmul.f32 %v158, 3.1622777
  %v161 = vmul.f32 %v147, %v159
  %v162 = vmul.f32 %v148, %v160
  %v163 = vmul.f32 %v161, 0.5
  %v164 = vmul.f32 %v162, 0.5
  %v165 = vmul.f32 %v161, 0.70710677
  %v166 = vmul.f32 %v162, 0.70710677
  %v167 = verf.f32.pop %v165
  %v168 = verf.f32.pop %v166
  %v169 = vadd.f32 %v167, 1.0
  %v170 = vadd.f32 %v168, 1.0
  %v171 = vmul.f32 %v163, %v169
  %v172 = vmul.f32 %v164, %v170
  %v173 = vpack.c.bf16 %v172, %v171
  %v174 = vld [vmem:[%s2] sm:$0xf]
  %v175 = vld [vmem:[%s2 + $0x4] sm:$0xf]
  %v176 = vld [vmem:[%s2 + $0x8] sm:$0xf]
  %v177 = vld [vmem:[%s2 + $0xc] sm:$0xf]
  %v178 = vld [vmem:[%s2 + $0x10] sm:$0xf]
  %v179 = vld [vmem:[%s2 + $0x14] sm:$0xf]
  %v180 = vld [vmem:[%s2 + $0x18] sm:$0xf]
  %v181 = vld [vmem:[%s2 + $0x1c] sm:$0xf]
  %v182 = vld [vmem:[%s2 + $0x20] sm:$0xf]
  %v183 = vld [vmem:[%s2 + $0x24] sm:$0xf]
  %v184 = vld [vmem:[%s2 + $0x28] sm:$0xf]
  %v185 = vld [vmem:[%s2 + $0x2c] sm:$0xf]
  %v186 = vld [vmem:[%s2 + $0x30] sm:$0xf]
  %v187 = vld [vmem:[%s2 + $0x34] sm:$0xf]
  %v188 = vld [vmem:[%s2 + $0x38] sm:$0xf]
  %v189 = vld [vmem:[%s2 + $0x3c] sm:$0xf]
  %v206 = vunpack.c.l.b16 %v174
  %v207 = vunpack.c.l.b16 %v175
  %v208 = vunpack.c.l.b16 %v176
  %v209 = vunpack.c.l.b16 %v177
  %v210 = vunpack.c.l.b16 %v178
  %v211 = vunpack.c.l.b16 %v179
  %v212 = vunpack.c.l.b16 %v180
  %v213 = vunpack.c.l.b16 %v181
  %v214 = vunpack.c.l.b16 %v182
  %v215 = vunpack.c.l.b16 %v183
  %v216 = vunpack.c.l.b16 %v184
  %v217 = vunpack.c.l.b16 %v185
  %v218 = vunpack.c.l.b16 %v186
  %v219 = vunpack.c.l.b16 %v187
  %v220 = vunpack.c.l.b16 %v188
  %v221 = vunpack.c.l.b16 %v189
  %v222 = vpack.c.b16 %v207, %v206
  %v223 = vpack.c.b16 %v209, %v208
  %v224 = vpack.c.b16 %v211, %v210
  %v225 = vpack.c.b16 %v213, %v212
  %v226 = vpack.c.b16 %v215, %v214
  %v227 = vpack.c.b16 %v217, %v216
  %v228 = vpack.c.b16 %v219, %v218
  %v229 = vpack.c.b16 %v221, %v220
  %238 = vmatprep.subr.bf16.mxu0 0
  %239 = vmatpush1.bf16.msra.mxu0 %v222
  %240 = vmatprep.subr.bf16.mxu0 0
  %241 = vmatpush1.bf16.msra.mxu0 %v223
  %242 = vmatprep.subr.bf16.mxu0 0
  %243 = vmatpush1.bf16.msra.mxu0 %v224
  %244 = vmatprep.subr.bf16.mxu0 0
  %245 = vmatpush1.bf16.msra.mxu0 %v225
  %246 = vmatprep.subr.bf16.mxu0 0
  %247 = vmatpush1.bf16.msra.mxu0 %v226
  %248 = vmatprep.subr.bf16.mxu0 0
  %249 = vmatpush1.bf16.msra.mxu0 %v227
  %250 = vmatprep.subr.bf16.mxu0 0
  %251 = vmatpush1.bf16.msra.mxu0 %v228
  %252 = vmatprep.subr.bf16.mxu0 0
  %253 = vmatpush1.bf16.msra.mxu0 %v229
  %254 = vmatprep.subr.bf16.mxu0 0
  %255 = vmatpush1.bf16.msra.mxu0 0
  %256 = vmatprep.subr.bf16.mxu0 0
  %257 = vmatpush1.bf16.msra.mxu0 0
  %258 = vmatprep.subr.bf16.mxu0 0
  %259 = vmatpush1.bf16.msra.mxu0 0
  %260 = vmatprep.subr.bf16.mxu0 0
  %261 = vmatpush1.bf16.msra.mxu0 0
  %262 = vmatprep.subr.bf16.mxu0 0
  %263 = vmatpush1.bf16.msra.mxu0 0
  %264 = vmatprep.subr.bf16.mxu0 0
  %265 = vmatpush1.bf16.msra.mxu0 0
  %266 = vmatprep.subr.bf16.mxu0 0
  %267 = vmatpush1.bf16.msra.mxu0 0
  %268 = vmatprep.subr.bf16.mxu0 0
  %269 = vmatpush1.bf16.msra.mxu0 0
  %270 = vmatprep.mubr.bf16.mxu0 0
  %271 = vmatmul.mubr.bf16.gmra.mrb[0].mxu0 %v173
  %v272 = vpop.f32.mrb[0].mxu0
  %v273 = vadd.f32 0.0, %v272
  %v274 = vpop.f32.mrb[0].mxu0
  %v275 = vpop.f32.mrb[0].mxu0
  %v276 = vadd.f32 0.0, %v275
  %v277 = vpop.f32.mrb[0].mxu0
  %278 = vdwg.mxu0
  %v279 = vpack.c.bf16 %v276, %v273
  %v281 = vunpack.c.l.b16 %v279
  %v282 = vunpack.c.h.b16 %v279
  %v283 = vpack.c.b16 %v281, %v281
  %v284 = vpack.c.b16 %v282, %v282
  %vm287 = vcmask 257024
  %288 = vst.msk [vmem:[%s3] sm:$0xf] %vm287, %v283
  %289 = vst.msk [vmem:[%s3 + $0x4] sm:$0xf] %vm287, %v284
  // Predicated region
  $region14: #{tokenformer_forward.7} parent=0 // pred_check
    _
  $region15: #{tokenformer_forward.7} parent=0 // pred_check_branch
    %291 = sbr.rel (0) target = $region17
  $region16: #{tokenformer_forward.7} parent=0 // pred_region
    _
  $region17: #{tokenformer_forward.7} parent=0 // pred_fallthru
    _
  // Predicated region
  $region18: #{tokenformer_forward.7} parent=0 // pred_check
    _
  $region19: #{tokenformer_forward.7} parent=0 // pred_check_branch
    %293 = sbr.rel (0) target = $region21
  $region20: #{tokenformer_forward.7} parent=0 // pred_region
    _
  $region21: #{tokenformer_forward.7} parent=0 // pred_fallthru
    _

// kernel: tokenformer_forward.5
$region0: #{tokenformer_forward.5}
  #allocation0 [shape = 'u32[]', space=smem, size = 0x4, offset = 0x4, fixed_abs, tag = 'smem constant byte address 0x4 - core index']
  #allocation1 [shape = 'u32[144,128]{1,0:T(1,128)}', space=vmem, size = 0x12000, scoped, tag = 'internal scratch']
  %s0 = inlined_call_operand.vmem [shape: bf16[16,32], index: 0, kind: input, shape index: {}]
  %s1 = inlined_call_operand.vmem [shape: bf16[384,32], index: 1, kind: input, shape index: {}]
  %s2 = inlined_call_operand.vmem [shape: bf16[128,32], index: 2, kind: input, shape index: {}]
  %s3 = inlined_call_operand.vmem [shape: bf16[128,32], index: 3, kind: input, shape index: {}]
  %s4 = inlined_call_operand.vmem [shape: bf16[128,32], index: 4, kind: input, shape index: {}]
  %s5 = inlined_call_operand.vmem [shape: bf16[16,32], index: 5, kind: output, shape index: {0}]
  %s6 = inlined_call_operand.vmem [shape: bf16[16,32], index: 6, kind: output, shape index: {1}]
  %s7 = inlined_call_operand.vmem [shape: bf16[16,32], index: 7, kind: output, shape index: {2}]
  %8 = xla_tuple %s5, %s6, %s7
  %s9 = sld [smem:[#allocation0]]
  $region46: #{tokenformer_forward.5} parent=0
    _
  %s11 = ssub.s32 1, %s9
  %s12 = scalar_select 0, %s11, %s9
  // Predicated region
  $region2: #{tokenformer_forward.5} parent=0 // pred_check
    _
  $region3: #{tokenformer_forward.5} parent=0 // pred_check_branch
    %14 = sbr.rel (0) target = $region5
  $region4: #{tokenformer_forward.5} parent=0 // pred_region
    _
  $region5: #{tokenformer_forward.5} parent=0 // pred_fallthru
    _
  // Predicated region
  $region6: #{tokenformer_forward.5} parent=0 // pred_check
    _
  $region7: #{tokenformer_forward.5} parent=0 // pred_check_branch
    %16 = sbr.rel (0) target = $region9
  $region8: #{tokenformer_forward.5} parent=0 // pred_region
    _
  $region9: #{tokenformer_forward.5} parent=0 // pred_fallthru
    _
  // Predicated region
  $region10: #{tokenformer_forward.5} parent=0 // pred_check
    _
  $region11: #{tokenformer_forward.5} parent=0 // pred_check_branch
    %18 = sbr.rel (0) target = $region13
  $region12: #{tokenformer_forward.5} parent=0 // pred_region
    _
  $region13: #{tokenformer_forward.5} parent=0 // pred_fallthru
    _
  // Predicated region
  $region14: #{tokenformer_forward.5} parent=0 // pred_check
    _
  $region15: #{tokenformer_forward.5} parent=0 // pred_check_branch
    %20 = sbr.rel (0) target = $region17
  $region16: #{tokenformer_forward.5} parent=0 // pred_region
    _
  $region17: #{tokenformer_forward.5} parent=0 // pred_fallthru
    _
  // Predicated region
  $region18: #{tokenformer_forward.5} parent=0 // pred_check
    _
  $region19: #{tokenformer_forward.5} parent=0 // pred_check_branch
    %22 = sbr.rel (0) target = $region21
  $region20: #{tokenformer_forward.5} parent=0 // pred_region
    _
  $region21: #{tokenformer_forward.5} parent=0 // pred_fallthru
    _
  %v24 = vld [vmem:[%s0] sm:$0xf]
  %v25 = vld [vmem:[%s0 + $0x4] sm:$0xf]
  %v26 = vld [vmem:[%s1] sm:$0xf]
  %v27 = vld [vmem:[%s1 + $0x4] sm:$0xf]
  %v28 = vld [vmem:[%s1 + $0x8] sm:$0xf]
  %v29 = vld [vmem:[%s1 + $0xc] sm:$0xf]
  %v30 = vld [vmem:[%s1 + $0x10] sm:$0xf]
  %v31 = vld [vmem:[%s1 + $0x14] sm:$0xf]
  %v32 = vld [vmem:[%s1 + $0x18] sm:$0xf]
  %v33 = vld [vmem:[%s1 + $0x1c] sm:$0xf]
  %v34 = vld [vmem:[%s1 + $0x20] sm:$0xf]
  %v35 = vld [vmem:[%s1 + $0x24] sm:$0xf]
  %v36 = vld [vmem:[%s1 + $0x28] sm:$0xf]
  %v37 = vld [vmem:[%s1 + $0x2c] sm:$0xf]
  %v38 = vld [vmem:[%s1 + $0x30] sm:$0xf]
  %v39 = vld [vmem:[%s1 + $0x34] sm:$0xf]
  %v40 = vld [vmem:[%s1 + $0x38] sm:$0xf]
  %v41 = vld [vmem:[%s1 + $0x3c] sm:$0xf]
  %v42 = vld [vmem:[%s1 + $0x40] sm:$0xf]
  %v43 = vld [vmem:[%s1 + $0x44] sm:$0xf]
  %v44 = vld [vmem:[%s1 + $0x48] sm:$0xf]
  %v45 = vld [vmem:[%s1 + $0x4c] sm:$0xf]
  %v46 = vld [vmem:[%s1 + $0x50] sm:$0xf]
  %v47 = vld [vmem:[%s1 + $0x54] sm:$0xf]
  %v48 = vld [vmem:[%s1 + $0x58] sm:$0xf]
  %v49 = vld [vmem:[%s1 + $0x5c] sm:$0xf]
  %v50 = vld [vmem:[%s1 + $0x60] sm:$0xf]
  %v51 = vld [vmem:[%s1 + $0x64] sm:$0xf]
  %v52 = vld [vmem:[%s1 + $0x68] sm:$0xf]
  %v53 = vld [vmem:[%s1 + $0x6c] sm:$0xf]
  %v54 = vld [vmem:[%s1 + $0x70] sm:$0xf]
  %v55 = vld [vmem:[%s1 + $0x74] sm:$0xf]
  %v56 = vld [vmem:[%s1 + $0x78] sm:$0xf]
  %v57 = vld [vmem:[%s1 + $0x7c] sm:$0xf]
  %v58 = vld [vmem:[%s1 + $0x80] sm:$0xf]
  %v59 = vld [vmem:[%s1 + $0x84] sm:$0xf]
  %v60 = vld [vmem:[%s1 + $0x88] sm:$0xf]
  %v61 = vld [vmem:[%s1 + $0x8c] sm:$0xf]
  %v62 = vld [vmem:[%s1 + $0x90] sm:$0xf]
  %v63 = vld [vmem:[%s1 + $0x94] sm:$0xf]
  %v64 = vld [vmem:[%s1 + $0x98] sm:$0xf]
  %v65 = vld [vmem:[%s1 + $0x9c] sm:$0xf]
  %v66 = vld [vmem:[%s1 + $0xa0] sm:$0xf]
  %v67 = vld [vmem:[%s1 + $0xa4] sm:$0xf]
  %v68 = vld [vmem:[%s1 + $0xa8] sm:$0xf]
  %v69 = vld [vmem:[%s1 + $0xac] sm:$0xf]
  %v70 = vld [vmem:[%s1 + $0xb0] sm:$0xf]
  %v71 = vld [vmem:[%s1 + $0xb4] sm:$0xf]
  %v72 = vld [vmem:[%s1 + $0xb8] sm:$0xf]
  %v73 = vld [vmem:[%s1 + $0xbc] sm:$0xf]
  %v76 = vunpack.c.l.b16 %v24
  %v77 = vunpack.c.l.b16 %v25
  %v78 = vpack.c.b16 %v77, %v76
  %v127 = vunpack.c.l.b16 %v26
  %v128 = vunpack.c.l.b16 %v27
  %v129 = vunpack.c.l.b16 %v28
  %v130 = vunpack.c.l.b16 %v29
  %v131 = vunpack.c.l.b16 %v30
  %v132 = vunpack.c.l.b16 %v31
  %v133 = vunpack.c.l.b16 %v32
  %v134 = vunpack.c.l.b16 %v33
  %v135 = vunpack.c.l.b16 %v34
  %v136 = vunpack.c.l.b16 %v35
  %v137 = vunpack.c.l.b16 %v36
  %v138 = vunpack.c.l.b16 %v37
  %v139 = vunpack.c.l.b16 %v38
  %v140 = vunpack.c.l.b16 %v39
  %v141 = vunpack.c.l.b16 %v40
  %v142 = vunpack.c.l.b16 %v41
  %v143 = vunpack.c.l.b16 %v42
  %v144 = vunpack.c.l.b16 %v43
  %v145 = vunpack.c.l.b16 %v44
  %v146 = vunpack.c.l.b16 %v45
  %v147 = vunpack.c.l.b16 %v46
  %v148 = vunpack.c.l.b16 %v47
  %v149 = vunpack.c.l.b16 %v48
  %v150 = vunpack.c.l.b16 %v49
  %v151 = vunpack.c.l.b16 %v50
  %v152 = vunpack.c.l.b16 %v51
  %v153 = vunpack.c.l.b16 %v52
  %v154 = vunpack.c.l.b16 %v53
  %v155 = vunpack.c.l.b16 %v54
  %v156 = vunpack.c.l.b16 %v55
  %v157 = vunpack.c.l.b16 %v56
  %v158 = vunpack.c.l.b16 %v57
  %v159 = vunpack.c.l.b16 %v58
  %v160 = vunpack.c.l.b16 %v59
  %v161 = vunpack.c.l.b16 %v60
  %v162 = vunpack.c.l.b16 %v61
  %v163 = vunpack.c.l.b16 %v62
  %v164 = vunpack.c.l.b16 %v63
  %v165 = vunpack.c.l.b16 %v64
  %v166 = vunpack.c.l.b16 %v65
  %v167 = vunpack.c.l.b16 %v66
  %v168 = vunpack.c.l.b16 %v67
  %v169 = vunpack.c.l.b16 %v68
  %v170 = vunpack.c.l.b16 %v69
  %v171 = vunpack.c.l.b16 %v70
  %v172 = vunpack.c.l.b16 %v71
  %v173 = vunpack.c.l.b16 %v72
  %v174 = vunpack.c.l.b16 %v73
  %v175 = vpack.c.b16 %v128, %v127
  %v176 = vpack.c.b16 %v130, %v129
  %v177 = vpack.c.b16 %v132, %v131
  %v178 = vpack.c.b16 %v134, %v133
  %v179 = vpack.c.b16 %v136, %v135
  %v180 = vpack.c.b16 %v138, %v137
  %v181 = vpack.c.b16 %v140, %v139
  %v182 = vpack.c.b16 %v142, %v141
  %v183 = vpack.c.b16 %v144, %v143
  %v184 = vpack.c.b16 %v146, %v145
  %v185 = vpack.c.b16 %v148, %v147
  %v186 = vpack.c.b16 %v150, %v149
  %v187 = vpack.c.b16 %v152, %v151
  %v188 = vpack.c.b16 %v154, %v153
  %v189 = vpack.c.b16 %v156, %v155
  %v190 = vpack.c.b16 %v158, %v157
  %v191 = vpack.c.b16 %v160, %v159
  %v192 = vpack.c.b16 %v162, %v161
  %v193 = vpack.c.b16 %v164, %v163
  %v194 = vpack.c.b16 %v166, %v165
  %v195 = vpack.c.b16 %v168, %v167
  %v196 = vpack.c.b16 %v170, %v169
  %v197 = vpack.c.b16 %v172, %v171
  %v198 = vpack.c.b16 %v174, %v173
  %vm199 = vcmask 261120
  %v201 = vsel %vm199, %v78, 0
  %v204 = vsel %vm199, %v175, 0
  %v207 = vsel %vm199, %v176, 0
  %v210 = vsel %vm199, %v177, 0
  %v213 = vsel %vm199, %v178, 0
  %v216 = vsel %vm199, %v179, 0
  %v219 = vsel %vm199, %v180, 0
  %v222 = vsel %vm199, %v181, 0
  %v225 = vsel %vm199, %v182, 0
  %v228 = vsel %vm199, %v183, 0
  %v231 = vsel %vm199, %v184, 0
  %v234 = vsel %vm199, %v185, 0
  %v237 = vsel %vm199, %v186, 0
  %v240 = vsel %vm199, %v187, 0
  %v243 = vsel %vm199, %v188, 0
  %v246 = vsel %vm199, %v189, 0
  %v249 = vsel %vm199, %v190, 0
  %v252 = vsel %vm199, %v191, 0
  %v255 = vsel %vm199, %v192, 0
  %v258 = vsel %vm199, %v193, 0
  %v261 = vsel %vm199, %v194, 0
  %v264 = vsel %vm199, %v195, 0
  %v267 = vsel %vm199, %v196, 0
  %v270 = vsel %vm199, %v197, 0
  %v273 = vsel %vm199, %v198, 0
  %275 = vmatprep.subr.bf16.mxu0 0
  %276 = vmatpush1.bf16.xpose.msra.mxu0 %v204
  %277 = vmatprep.subr.bf16.mxu0 0
  %278 = vmatpush1.bf16.xpose.msra.mxu0 %v207
  %279 = vmatprep.subr.bf16.mxu0 0
  %280 = vmatpush1.bf16.xpose.msra.mxu0 %v210
  %281 = vmatprep.subr.bf16.mxu0 0
  %282 = vmatpush1.bf16.xpose.msra.mxu0 %v213
  %283 = vmatprep.subr.bf16.mxu0 0
  %284 = vmatpush1.bf16.xpose.msra.mxu0 %v216
  %285 = vmatprep.subr.bf16.mxu0 0
  %286 = vmatpush1.bf16.xpose.msra.mxu0 %v219
  %287 = vmatprep.subr.bf16.mxu0 0
  %288 = vmatpush1.bf16.xpose.msra.mxu0 %v222
  %289 = vmatprep.subr.bf16.mxu0 0
  %290 = vmatpush1.bf16.xpose.msra.mxu0 %v225
  %291 = vmatprep.subr.bf16.mxu0 0
  %292 = vmatpush1.bf16.xpose.msra.mxu0 %v228
  %293 = vmatprep.subr.bf16.mxu0 0
  %294 = vmatpush1.bf16.xpose.msra.mxu0 %v231
  %295 = vmatprep.subr.bf16.mxu0 0
  %296 = vmatpush1.bf16.xpose.msra.mxu0 %v234
  %297 = vmatprep.subr.bf16.mxu0 0
  %298 = vmatpush1.bf16.xpose.msra.mxu0 %v237
  %299 = vmatprep.subr.bf16.mxu0 0
  %300 = vmatpush1.bf16.xpose.msra.mxu0 %v240
  %301 = vmatprep.subr.bf16.mxu0 0
  %302 = vmatpush1.bf16.xpose.msra.mxu0 %v243
  %303 = vmatprep.subr.bf16.mxu0 0
  %304 = vmatpush1.bf16.xpose.msra.mxu0 %v246
  %305 = vmatprep.subr.bf16.mxu0 0
  %306 = vmatpush1.bf16.xpose.msra.mxu0 %v249
  %307 = vmatprep.mubr.bf16.mxu0 0
  %308 = vmatmul.mubr.bf16.gmra.mrb[0].mxu0 %v201
  %v309 = vpop.f32.mrb[0].mxu0
  %v310 = vadd.f32 0.0, %v309
  %v311 = vpop.f32.mrb[0].mxu0
  %v312 = vadd.f32 0.0, %v311
  %v313 = vpop.f32.mrb[0].mxu0
  %v314 = vadd.f32 0.0, %v313
  %v315 = vpop.f32.mrb[0].mxu0
  %v316 = vadd.f32 0.0, %v315
  %317 = vdwg.mxu0
  %318 = vmatprep.subr.bf16.mxu0 0
  %319 = vmatpush1.bf16.xpose.msra.mxu0 %v252
  %320 = vmatprep.subr.bf16.mxu0 0
  %321 = vmatpush1.bf16.xpose.msra.mxu0 %v255
  %322 = vmatprep.subr.bf16.mxu0 0
  %323 = vmatpush1.bf16.xpose.msra.mxu0 %v258
  %324 = vmatprep.subr.bf16.mxu0 0
  %325 = vmatpush1.bf16.xpose.msra.mxu0 %v261
  %326 = vmatprep.subr.bf16.mxu0 0
  %327 = vmatpush1.bf16.xpose.msra.mxu0 %v264
  %328 = vmatprep.subr.bf16.mxu0 0
  %329 = vmatpush1.bf16.xpose.msra.mxu0 %v267
  %330 = vmatprep.subr.bf16.mxu0 0
  %331 = vmatpush1.bf16.xpose.msra.mxu0 %v270
  %332 = vmatprep.subr.bf16.mxu0 0
  %333 = vmatpush1.bf16.xpose.msra.mxu0 %v273
  %334 = vmatprep.subr.bf16.mxu0 0
  %335 = vmatpush1.bf16.xpose.msra.mxu0 0
  %336 = vmatprep.subr.bf16.mxu0 0
  %337 = vmatpush1.bf16.xpose.msra.mxu0 0
  %338 = vmatprep.subr.bf16.mxu0 0
  %339 = vmatpush1.bf16.xpose.msra.mxu0 0
  %340 = vmatprep.subr.bf16.mxu0 0
  %341 = vmatpush1.bf16.xpose.msra.mxu0 0
  %342 = vmatprep.subr.bf16.mxu0 0
  %343 = vmatpush1.bf16.xpose.msra.mxu0 0
  %344 = vmatprep.subr.bf16.mxu0 0
  %345 = vmatpush1.bf16.xpose.msra.mxu0 0
  %346 = vmatprep.subr.bf16.mxu0 0
  %347 = vmatpush1.bf16.xpose.msra.mxu0 0
  %348 = vmatprep.subr.bf16.mxu0 0
  %349 = vmatpush1.bf16.xpose.msra.mxu0 0
  %350 = vmatprep.mubr.bf16.mxu0 0
  %351 = vmatmul.mubr.bf16.gmra.mrb[0].mxu0 %v201
  %v352 = vpop.f32.mrb[0].mxu0
  %v353 = vadd.f32 0.0, %v352
  %v354 = vpop.f32.mrb[0].mxu0
  %v355 = vpop.f32.mrb[0].mxu0
  %v356 = vadd.f32 0.0, %v355
  %v357 = vpop.f32.mrb[0].mxu0
  %358 = vdwg.mxu0
  %v359 = vmul.f32 %v310, 0.17677669
  %v360 = vmul.f32 %v312, 0.17677669
  %v361 = vmul.f32 %v353, 0.17677669
  %v362 = vmul.f32 %v314, 0.17677669
  %v363 = vmul.f32 %v316, 0.17677669
  %v364 = vmul.f32 %v356, 0.17677669
  %v365 = vmul.f32 %v359, %v359
  %v366 = vmul.f32 %v362, %v362
  %367 = vadd.xlane.f32.xlu0 %v365
  %v368 = vpop.xlane.xlu0 %367
  %369 = vadd.xlane.f32.xlu0 %v366
  %v370 = vpop.xlane.xlu0 %369
  %v371 = vadd.f32 %v368, 1e-12
  %v372 = vadd.f32 %v370, 1e-12
  %v373 = vrsqrt.pop %v371
  %v374 = vrsqrt.pop %v372
  %v375 = vmul.f32 %v373, 3.1622777
  %v376 = vmul.f32 %v374, 3.1622777
  %v377 = vmul.f32 %v359, %v375
  %v378 = vmul.f32 %v362, %v376
  %v379 = vmul.f32 %v377, 0.5
  %v380 = vmul.f32 %v378, 0.5
  %v381 = vmul.f32 %v377, 0.70710677
  %v382 = vmul.f32 %v378, 0.70710677
  %v383 = verf.f32.pop %v381
  %v384 = verf.f32.pop %v382
  %v385 = vadd.f32 %v383, 1.0
  %v386 = vadd.f32 %v384, 1.0
  %v387 = vmul.f32 %v379, %v385
  %v388 = vmul.f32 %v380, %v386
  %v389 = vpack.c.bf16 %v388, %v387
  %v390 = vld [vmem:[%s2] sm:$0xf]
  %v391 = vld [vmem:[%s2 + $0x4] sm:$0xf]
  %v392 = vld [vmem:[%s2 + $0x8] sm:$0xf]
  %v393 = vld [vmem:[%s2 + $0xc] sm:$0xf]
  %v394 = vld [vmem:[%s2 + $0x10] sm:$0xf]
  %v395 = vld [vmem:[%s2 + $0x14] sm:$0xf]
  %v396 = vld [vmem:[%s2 + $0x18] sm:$0xf]
  %v397 = vld [vmem:[%s2 + $0x1c] sm:$0xf]
  %v398 = vld [vmem:[%s2 + $0x20] sm:$0xf]
  %v399 = vld [vmem:[%s2 + $0x24] sm:$0xf]
  %v400 = vld [vmem:[%s2 + $0x28] sm:$0xf]
  %v401 = vld [vmem:[%s2 + $0x2c] sm:$0xf]
  %v402 = vld [vmem:[%s2 + $0x30] sm:$0xf]
  %v403 = vld [vmem:[%s2 + $0x34] sm:$0xf]
  %v404 = vld [vmem:[%s2 + $0x38] sm:$0xf]
  %v405 = vld [vmem:[%s2 + $0x3c] sm:$0xf]
  %v422 = vunpack.c.l.b16 %v390
  %v423 = vunpack.c.l.b16 %v391
  %v424 = vunpack.c.l.b16 %v392
  %v425 = vunpack.c.l.b16 %v393
  %v426 = vunpack.c.l.b16 %v394
  %v427 = vunpack.c.l.b16 %v395
  %v428 = vunpack.c.l.b16 %v396
  %v429 = vunpack.c.l.b16 %v397
  %v430 = vunpack.c.l.b16 %v398
  %v431 = vunpack.c.l.b16 %v399
  %v432 = vunpack.c.l.b16 %v400
  %v433 = vunpack.c.l.b16 %v401
  %v434 = vunpack.c.l.b16 %v402
  %v435 = vunpack.c.l.b16 %v403
  %v436 = vunpack.c.l.b16 %v404
  %v437 = vunpack.c.l.b16 %v405
  %v438 = vpack.c.b16 %v423, %v422
  %v439 = vpack.c.b16 %v425, %v424
  %v440 = vpack.c.b16 %v427, %v426
  %v441 = vpack.c.b16 %v429, %v428
  %v442 = vpack.c.b16 %v431, %v430
  %v443 = vpack.c.b16 %v433, %v432
  %v444 = vpack.c.b16 %v435, %v434
  %v445 = vpack.c.b16 %v437, %v436
  %454 = vmatprep.subr.bf16.mxu0 0
  %455 = vmatpush1.bf16.msra.mxu0 %v438
  %456 = vmatprep.subr.bf16.mxu0 0
  %457 = vmatpush1.bf16.msra.mxu0 %v439
  %458 = vmatprep.subr.bf16.mxu0 0
  %459 = vmatpush1.bf16.msra.mxu0 %v440
  %460 = vmatprep.subr.bf16.mxu0 0
  %461 = vmatpush1.bf16.msra.mxu0 %v441
  %462 = vmatprep.subr.bf16.mxu0 0
  %463 = vmatpush1.bf16.msra.mxu0 %v442
  %464 = vmatprep.subr.bf16.mxu0 0
  %465 = vmatpush1.bf16.msra.mxu0 %v443
  %466 = vmatprep.subr.bf16.mxu0 0
  %467 = vmatpush1.bf16.msra.mxu0 %v444
  %468 = vmatprep.subr.bf16.mxu0 0
  %469 = vmatpush1.bf16.msra.mxu0 %v445
  %470 = vmatprep.subr.bf16.mxu0 0
  %471 = vmatpush1.bf16.msra.mxu0 0
  %472 = vmatprep.subr.bf16.mxu0 0
  %473 = vmatpush1.bf16.msra.mxu0 0
  %474 = vmatprep.subr.bf16.mxu0 0
  %475 = vmatpush1.bf16.msra.mxu0 0
  %476 = vmatprep.subr.bf16.mxu0 0
  %477 = vmatpush1.bf16.msra.mxu0 0
  %478 = vmatprep.subr.bf16.mxu0 0
  %479 = vmatpush1.bf16.msra.mxu0 0
  %480 = vmatprep.subr.bf16.mxu0 0
  %481 = vmatpush1.bf16.msra.mxu0 0
  %482 = vmatprep.subr.bf16.mxu0 0
  %483 = vmatpush1.bf16.msra.mxu0 0
  %484 = vmatprep.subr.bf16.mxu0 0
  %485 = vmatpush1.bf16.msra.mxu0 0
  %486 = vmatprep.mubr.bf16.mxu0 0
  %487 = vmatmul.mubr.bf16.gmra.mrb[0].mxu0 %v389
  %v488 = vpop.f32.mrb[0].mxu0
  %v489 = vadd.f32 0.0, %v488
  %v490 = vpop.f32.mrb[0].mxu0
  %v491 = vpop.f32.mrb[0].mxu0
  %v492 = vadd.f32 0.0, %v491
  %v493 = vpop.f32.mrb[0].mxu0
  %494 = vdwg.mxu0
  %v495 = vpack.c.bf16 %v492, %v489
  %v497 = vunpack.c.l.b16 %v495
  %v498 = vunpack.c.h.b16 %v495
  %v499 = vpack.c.b16 %v497, %v497
  %v500 = vpack.c.b16 %v498, %v498
  %vm503 = vcmask 257024
  %504 = vst.msk [vmem:[%s5] sm:$0xf] %vm503, %v499
  %505 = vst.msk [vmem:[%s5 + $0x4] sm:$0xf] %vm503, %v500
  %v506 = vmul.f32 %v360, %v360
  %v507 = vmul.f32 %v363, %v363
  %508 = vadd.xlane.f32.xlu0 %v506
  %v509 = vpop.xlane.xlu0 %508
  %510 = vadd.xlane.f32.xlu0 %v507
  %v511 = vpop.xlane.xlu0 %510
  %v512 = vadd.f32 %v509, 1e-12
  %v513 = vadd.f32 %v511, 1e-12
  %v514 = vrsqrt.pop %v512
  %v515 = vrsqrt.pop %v513
  %v516 = vmul.f32 %v514, 3.1622777
  %v517 = vmul.f32 %v515, 3.1622777
  %v518 = vmul.f32 %v360, %v516
  %v519 = vmul.f32 %v363, %v517
  %v520 = vmul.f32 %v518, 0.5
  %v521 = vmul.f32 %v519, 0.5
  %v522 = vmul.f32 %v518, 0.70710677
  %v523 = vmul.f32 %v519, 0.70710677
  %v524 = verf.f32.pop %v522
  %v525 = verf.f32.pop %v523
  %v526 = vadd.f32 %v524, 1.0
  %v527 = vadd.f32 %v525, 1.0
  %v528 = vmul.f32 %v520, %v526
  %v529 = vmul.f32 %v521, %v527
  %v530 = vpack.c.bf16 %v529, %v528
  %v531 = vld [vmem:[%s3] sm:$0xf]
  %v532 = vld [vmem:[%s3 + $0x4] sm:$0xf]
  %v533 = vld [vmem:[%s3 + $0x8] sm:$0xf]
  %v534 = vld [vmem:[%s3 + $0xc] sm:$0xf]
  %v535 = vld [vmem:[%s3 + $0x10] sm:$0xf]
  %v536 = vld [vmem:[%s3 + $0x14] sm:$0xf]
  %v537 = vld [vmem:[%s3 + $0x18] sm:$0xf]
  %v538 = vld [vmem:[%s3 + $0x1c] sm:$0xf]
  %v539 = vld [vmem:[%s3 + $0x20] sm:$0xf]
  %v540 = vld [vmem:[%s3 + $0x24] sm:$0xf]
  %v541 = vld [vmem:[%s3 + $0x28] sm:$0xf]
  %v542 = vld [vmem:[%s3 + $0x2c] sm:$0xf]
  %v543 = vld [vmem:[%s3 + $0x30] sm:$0xf]
  %v544 = vld [vmem:[%s3 + $0x34] sm:$0xf]
  %v545 = vld [vmem:[%s3 + $0x38] sm:$0xf]
  %v546 = vld [vmem:[%s3 + $0x3c] sm:$0xf]
  %v563 = vunpack.c.l.b16 %v531
  %v564 = vunpack.c.l.b16 %v532
  %v565 = vunpack.c.l.b16 %v533
  %v566 = vunpack.c.l.b16 %v534
  %v567 = vunpack.c.l.b16 %v535
  %v568 = vunpack.c.l.b16 %v536
  %v569 = vunpack.c.l.b16 %v537
  %v570 = vunpack.c.l.b16 %v538
  %v571 = vunpack.c.l.b16 %v539
  %v572 = vunpack.c.l.b16 %v540
  %v573 = vunpack.c.l.b16 %v541
  %v574 = vunpack.c.l.b16 %v542
  %v575 = vunpack.c.l.b16 %v543
  %v576 = vunpack.c.l.b16 %v544
  %v577 = vunpack.c.l.b16 %v545
  %v578 = vunpack.c.l.b16 %v546
  %v579 = vpack.c.b16 %v564, %v563
  %v580 = vpack.c.b16 %v566, %v565
  %v581 = vpack.c.b16 %v568, %v567
  %v582 = vpack.c.b16 %v570, %v569
  %v583 = vpack.c.b16 %v572, %v571
  %v584 = vpack.c.b16 %v574, %v573
  %v585 = vpack.c.b16 %v576, %v575
  %v586 = vpack.c.b16 %v578, %v577
  %595 = vmatprep.subr.bf16.mxu0 0
  %596 = vmatpush1.bf16.msra.mxu0 %v579
  %597 = vmatprep.subr.bf16.mxu0 0
  %598 = vmatpush1.bf16.msra.mxu0 %v580
  %599 = vmatprep.subr.bf16.mxu0 0
  %600 = vmatpush1.bf16.msra.mxu0 %v581
  %601 = vmatprep.subr.bf16.mxu0 0
  %602 = vmatpush1.bf16.msra.mxu0 %v582
  %603 = vmatprep.subr.bf16.mxu0 0
  %604 = vmatpush1.bf16.msra.mxu0 %v583
  %605 = vmatprep.subr.bf16.mxu0 0
  %606 = vmatpush1.bf16.msra.mxu0 %v584
  %607 = vmatprep.subr.bf16.mxu0 0
  %608 = vmatpush1.bf16.msra.mxu0 %v585
  %609 = vmatprep.subr.bf16.mxu0 0
  %610 = vmatpush1.bf16.msra.mxu0 %v586
  %611 = vmatprep.subr.bf16.mxu0 0
  %612 = vmatpush1.bf16.msra.mxu0 0
  %613 = vmatprep.subr.bf16.mxu0 0
  %614 = vmatpush1.bf16.msra.mxu0 0
  %615 = vmatprep.subr.bf16.mxu0 0
  %616 = vmatpush1.bf16.msra.mxu0 0
  %617 = vmatprep.subr.bf16.mxu0 0
  %618 = vmatpush1.bf16.msra.mxu0 0
  %619 = vmatprep.subr.bf16.mxu0 0
  %620 = vmatpush1.bf16.msra.mxu0 0
  %621 = vmatprep.subr.bf16.mxu0 0
  %622 = vmatpush1.bf16.msra.mxu0 0
  %623 = vmatprep.subr.bf16.mxu0 0
  %624 = vmatpush1.bf16.msra.mxu0 0
  %625 = vmatprep.subr.bf16.mxu0 0
  %626 = vmatpush1.bf16.msra.mxu0 0
  %627 = vmatprep.mubr.bf16.mxu0 0
  %628 = vmatmul.mubr.bf16.gmra.mrb[0].mxu0 %v530
  %v629 = vpop.f32.mrb[0].mxu0
  %v630 = vadd.f32 0.0, %v629
  %v631 = vpop.f32.mrb[0].mxu0
  %v632 = vpop.f32.mrb[0].mxu0
  %v633 = vadd.f32 0.0, %v632
  %v634 = vpop.f32.mrb[0].mxu0
  %635 = vdwg.mxu0
  %v636 = vpack.c.bf16 %v633, %v630
  %v638 = vunpack.c.l.b16 %v636
  %v639 = vunpack.c.h.b16 %v636
  %v640 = vpack.c.b16 %v638, %v638
  %v641 = vpack.c.b16 %v639, %v639
  %644 = vst.msk [vmem:[%s6] sm:$0xf] %vm503, %v640
  %645 = vst.msk [vmem:[%s6 + $0x4] sm:$0xf] %vm503, %v641
  %v646 = vmul.f32 %v361, %v361
  %v647 = vmul.f32 %v364, %v364
  %648 = vadd.xlane.f32.xlu0 %v646
  %v649 = vpop.xlane.xlu0 %648
  %650 = vadd.xlane.f32.xlu0 %v647
  %v651 = vpop.xlane.xlu0 %650
  %v652 = vadd.f32 %v649, 1e-12
  %v653 = vadd.f32 %v651, 1e-12
  %v654 = vrsqrt.pop %v652
  %v655 = vrsqrt.pop %v653
  %v656 = vmul.f32 %v654, 3.1622777
  %v657 = vmul.f32 %v655, 3.1622777
  %v658 = vmul.f32 %v361, %v656
  %v659 = vmul.f32 %v364, %v657
  %v660 = vmul.f32 %v658, 0.5
  %v661 = vmul.f32 %v659, 0.5
  %v662 = vmul.f32 %v658, 0.70710677
  %v663 = vmul.f32 %v659, 0.70710677
  %v664 = verf.f32.pop %v662
  %v665 = verf.f32.pop %v663
  %v666 = vadd.f32 %v664, 1.0
  %v667 = vadd.f32 %v665, 1.0
  %v668 = vmul.f32 %v660, %v666
  %v669 = vmul.f32 %v661, %v667
  %v670 = vpack.c.bf16 %v669, %v668
  %v671 = vld [vmem:[%s4] sm:$0xf]
  %v672 = vld [vmem:[%s4 + $0x4] sm:$0xf]
  %v673 = vld [vmem:[%s4 + $0x8] sm:$0xf]
  %v674 = vld [vmem:[%s4 + $0xc] sm:$0xf]
  %v675 = vld [vmem:[%s4 + $0x10] sm:$0xf]
  %v676 = vld [vmem:[%s4 + $0x14] sm:$0xf]
  %v677 = vld [vmem:[%s4 + $0x18] sm:$0xf]
  %v678 = vld [vmem:[%s4 + $0x1c] sm:$0xf]
  %v679 = vld [vmem:[%s4 + $0x20] sm:$0xf]
  %v680 = vld [vmem:[%s4 + $0x24] sm:$0xf]
  %v681 = vld [vmem:[%s4 + $0x28] sm:$0xf]
  %v682 = vld [vmem:[%s4 + $0x2c] sm:$0xf]
  %v683 = vld [vmem:[%s4 + $0x30] sm:$0xf]
  %v684 = vld [vmem:[%s4 + $0x34] sm:$0xf]
  %v685 = vld [vmem:[%s4 + $0x38] sm:$0xf]
  %v686 = vld [vmem:[%s4 + $0x3c] sm:$0xf]
  %v703 = vunpack.c.l.b16 %v671
  %v704 = vunpack.c.l.b16 %v672
  %v705 = vunpack.c.l.b16 %v673
  %v706 = vunpack.c.l.b16 %v674
  %v707 = vunpack.c.l.b16 %v675
  %v708 = vunpack.c.l.b16 %v676
  %v709 = vunpack.c.l.b16 %v677
  %v710 = vunpack.c.l.b16 %v678
  %v711 = vunpack.c.l.b16 %v679
  %v712 = vunpack.c.l.b16 %v680
  %v713 = vunpack.c.l.b16 %v681
  %v714 = vunpack.c.l.b16 %v682
  %v715 = vunpack.c.l.b16 %v683
  %v716 = vunpack.c.l.b16 %v684
  %v717 = vunpack.c.l.b16 %v685
  %v718 = vunpack.c.l.b16 %v686
  %v719 = vpack.c.b16 %v704, %v703
  %v720 = vpack.c.b16 %v706, %v705
  %v721 = vpack.c.b16 %v708, %v707
  %v722 = vpack.c.b16 %v710, %v709
  %v723 = vpack.c.b16 %v712, %v711
  %v724 = vpack.c.b16 %v714, %v713
  %v725 = vpack.c.b16 %v716, %v715
  %v726 = vpack.c.b16 %v718, %v717
  %735 = vmatprep.subr.bf16.mxu0 0
  %736 = vmatpush1.bf16.msra.mxu0 %v719
  %737 = vmatprep.subr.bf16.mxu0 0
  %738 = vmatpush1.bf16.msra.mxu0 %v720
  %739 = vmatprep.subr.bf16.mxu0 0
  %740 = vmatpush1.bf16.msra.mxu0 %v721
  %741 = vmatprep.subr.bf16.mxu0 0
  %742 = vmatpush1.bf16.msra.mxu0 %v722
  %743 = vmatprep.subr.bf16.mxu0 0
  %744 = vmatpush1.bf16.msra.mxu0 %v723
  %745 = vmatprep.subr.bf16.mxu0 0
  %746 = vmatpush1.bf16.msra.mxu0 %v724
  %747 = vmatprep.subr.bf16.mxu0 0
  %748 = vmatpush1.bf16.msra.mxu0 %v725
  %749 = vmatprep.subr.bf16.mxu0 0
  %750 = vmatpush1.bf16.msra.mxu0 %v726
  %751 = vmatprep.subr.bf16.mxu0 0
  %752 = vmatpush1.bf16.msra.mxu0 0
  %753 = vmatprep.subr.bf16.mxu0 0
  %754 = vmatpush1.bf16.msra.mxu0 0
  %755 = vmatprep.subr.bf16.mxu0 0
  %756 = vmatpush1.bf16.msra.mxu0 0
  %757 = vmatprep.subr.bf16.mxu0 0
  %758 = vmatpush1.bf16.msra.mxu0 0
  %759 = vmatprep.subr.bf16.mxu0 0
  %760 = vmatpush1.bf16.msra.mxu0 0
  %761 = vmatprep.subr.bf16.mxu0 0
  %762 = vmatpush1.bf16.msra.mxu0 0
  %763 = vmatprep.subr.bf16.mxu0 0
  %764 = vmatpush1.bf16.msra.mxu0 0
  %765 = vmatprep.subr.bf16.mxu0 0
  %766 = vmatpush1.bf16.msra.mxu0 0
  %767 = vmatprep.mubr.bf16.mxu0 0
  %768 = vmatmul.mubr.bf16.gmra.mrb[0].mxu0 %v670
  %v769 = vpop.f32.mrb[0].mxu0
  %v770 = vadd.f32 0.0, %v769
  %v771 = vpop.f32.mrb[0].mxu0
  %v772 = vpop.f32.mrb[0].mxu0
  %v773 = vadd.f32 0.0, %v772
  %v774 = vpop.f32.mrb[0].mxu0
  %775 = vdwg.mxu0
  %v776 = vpack.c.bf16 %v773, %v770
  %v778 = vunpack.c.l.b16 %v776
  %v779 = vunpack.c.h.b16 %v776
  %v780 = vpack.c.b16 %v778, %v778
  %v781 = vpack.c.b16 %v779, %v779
  %784 = vst.msk [vmem:[%s7] sm:$0xf] %vm503, %v780
  %785 = vst.msk [vmem:[%s7 + $0x4] sm:$0xf] %vm503, %v781
  // Predicated region
  $region22: #{tokenformer_forward.5} parent=0 // pred_check
    _
  $region23: #{tokenformer_forward.5} parent=0 // pred_check_branch
    %787 = sbr.rel (0) target = $region25
  $region24: #{tokenformer_forward.5} parent=0 // pred_region
    _
  $region25: #{tokenformer_forward.5} parent=0 // pred_fallthru
    _
  // Predicated region
  $region26: #{tokenformer_forward.5} parent=0 // pred_check
    _
  $region27: #{tokenformer_forward.5} parent=0 // pred_check_branch
    %789 = sbr.rel (0) target = $region29
  $region28: #{tokenformer_forward.5} parent=0 // pred_region
    _
  $region29: #{tokenformer_forward.5} parent=0 // pred_fallthru
    _
  // Predicated region
  $region30: #{tokenformer_forward.5} parent=0 // pred_check
    _
  $region31: #{tokenformer_forward.5} parent=0 // pred_check_branch
    %791 = sbr.rel (0) target = $region33
  $region32: #{tokenformer_forward.5} parent=0 // pred_region
    _
  $region33: #{tokenformer_forward.5} parent=0 // pred_fallthru
    _
  // Predicated region
  $region34: #{tokenformer_forward.5} parent=0 // pred_check
    _
  $region35: #{tokenformer_forward.5} parent=0 // pred_check_branch
    %793 = sbr.rel (0) target = $region37
  $region36: #{tokenformer_forward.5} parent=0 // pred_region
    _
  $region37: #{tokenformer_forward.5} parent=0 // pred_fallthru
    _
  // Predicated region
  $region38: #{tokenformer_forward.5} parent=0 // pred_check
    _
  $region39: #{tokenformer_forward.5} parent=0 // pred_check_branch
    %795 = sbr.rel (0) target = $region41
  $region40: #{tokenformer_forward.5} parent=0 // pred_region
    _
  $region41: #{tokenformer_forward.5} parent=0 // pred_fallthru
    _
  // Predicated region
  $region42: #{tokenformer_forward.5} parent=0 // pred_check
    _
  $region43: #{tokenformer_forward.5} parent=0 // pred_check_branch
    %797 = sbr.rel (0) target = $region45
  $region44: #{tokenformer_forward.5} parent=0 // pred_region
    _
  $region45: #{tokenformer_forward.5} parent=0 // pred_fallthru
    _

// kernel: tokenformer_forward.6
$region0: #{tokenformer_forward.6}
  #allocation0 [shape = 'u32[]', space=smem, size = 0x4, offset = 0x4, fixed_abs, tag = 'smem constant byte address 0x4 - core index']
  #allocation1 [shape = 'u32[144,128]{1,0:T(1,128)}', space=vmem, size = 0x12000, scoped, tag = 'internal scratch']
  #allocation2 [shape = 'f32[4,8,1]{2,1,0:T(8,128)}', space=vmem, size = 0x4000, scoped, tag = 'scratch operand']
  #allocation3 [shape = 'f32[4,8,1]{2,1,0:T(8,128)}', space=vmem, size = 0x4000, scoped, tag = 'scratch operand']
  #allocation4 [shape = 'f32[4,8,8]{2,1,0:T(8,128)}', space=vmem, size = 0x4000, scoped, tag = 'scratch operand']
  %s0 = inlined_call_operand.vmem [shape: bf16[2,8,32], index: 0, kind: input, shape index: {}]
  %s1 = inlined_call_operand.vmem [shape: bf16[2,8,32], index: 1, kind: input, shape index: {}]
  %s2 = inlined_call_operand.vmem [shape: bf16[2,8,32], index: 2, kind: input, shape index: {}]
  %s3 = inlined_call_operand.vmem [shape: bf16[2,8,32], index: 3, kind: output, shape index: {}]
  %s4 = sld [smem:[#allocation0]]
  $region53: #{tokenformer_forward.6} parent=0
    _
  %s6 = ssub.s32 1, %s4
  %s7 = scalar_select 0, %s6, %s4
  loop: start=0, step=1, limit=4
  $region2: #{tokenformer_forward.6} parent=0 // loop_pre_header
    _
  $region3: #{tokenformer_forward.6} parent=0 // loop_header
    %s9 = sphi 0, %s13
    %p10 = scmp.ge.s32.totalorder %s9, 4
    %s16 = sphi 0, %s28
    %s17 = sphi 0, %s24
    %s18 = sphi 0, %s16
    %s19 = sphi 0, %s17
    %s20 = sphi 0, %s18
    %s21 = sphi 0, %s19
    %s31 = sphi 0, %s33
    %s34 = sphi 0, %s31
    %s35 = sphi 0, %s34
    %s51 = sphi 0, %s35
    %s59 = sphi 0, %s61
    %s62 = sphi 0, %s59
    %s63 = sphi 0, %s62
    %s79 = sphi 0, %s63
    %s87 = sphi 0, %s89
    %s90 = sphi 0, %s87
    %s91 = sphi 0, %s90
    %s107 = sphi 0, %s91
    %s113 = sphi 0, %s115
    %s116 = sphi 0, %s113
    %s117 = sphi 0, %s116
    %s133 = sphi 0, %s117
  $region4: #{tokenformer_forward.6} parent=0 // loop_header_branch
    %12 = sbr.rel (%p10) target = $region8
  $region5: #{tokenformer_forward.6} parent=0 // loop_body
    %s14 = ssub.s32 %s9, 1
    %s15 = ssub.s32 %s9, 2
    %s22 = sadd.s32 1, %s17
    %p23 = scmp.ge.s32.totalorder %s22, 1
    %s24 = scalar_select %p23, 0, %s22
    %s25 = sadd.s32 1, %s16
    %s26 = scalar_select %p23, %s25, %s16
    %p27 = scmp.ge.s32.totalorder %s26, 2
    %s28 = scalar_select %p27, 0, %s26
    %s29 = ssub.s32 %s16, %s28
    %p30 = scmp.eq.s32.totalorder %s29, 0
    %s32 = sadd.s32 %s31, 1
    %s33 = scalar_select %p30, %s31, %s32
    %p36 = pneg %p30
    %p37 = scmp.eq.s32.totalorder %s9, 1
    %p38 = por %p36, %p37
    %p39 = scmp.ne.s32.totalorder %s31, %s34
    %p40 = scmp.eq.s32.totalorder %s9, 0
    %p41 = por %p39, %p40
    %p42 = scmp.ne.s32.totalorder %s31, %s34
    %p43 = scmp.eq.s32.totalorder %s14, 1
    %p44 = por %p42, %p43
    %p45 = scmp.ne.s32.totalorder %s34, %s35
    %p46 = scmp.eq.s32.totalorder %s14, 0
    %p47 = por %p45, %p46
    %p48 = scmp.ne.s32.totalorder %s34, %s35
    %p49 = scmp.eq.s32.totalorder %s15, 1
    %p50 = por %p48, %p49
    %p52 = scmp.ne.s32.totalorder %s35, %s51
    %p53 = scmp.eq.s32.totalorder %s15, 0
    %p54 = por %p52, %p53
    %s55 = ssub.s32 %s16, %s28
    %s56 = ssub.s32 %s17, %s24
    %s57 = sor.u32 %s55, %s56
    %p58 = scmp.eq.s32.totalorder %s57, 0
    %s60 = sadd.s32 %s59, 1
    %s61 = scalar_select %p58, %s59, %s60
    %p64 = pneg %p58
    %p65 = scmp.eq.s32.totalorder %s9, 1
    %p66 = por %p64, %p65
    %p67 = scmp.ne.s32.totalorder %s59, %s62
    %p68 = scmp.eq.s32.totalorder %s9, 0
    %p69 = por %p67, %p68
    %p70 = scmp.ne.s32.totalorder %s59, %s62
    %p71 = scmp.eq.s32.totalorder %s14, 1
    %p72 = por %p70, %p71
    %p73 = scmp.ne.s32.totalorder %s62, %s63
    %p74 = scmp.eq.s32.totalorder %s14, 0
    %p75 = por %p73, %p74
    %p76 = scmp.ne.s32.totalorder %s62, %s63
    %p77 = scmp.eq.s32.totalorder %s15, 1
    %p78 = por %p76, %p77
    %p80 = scmp.ne.s32.totalorder %s63, %s79
    %p81 = scmp.eq.s32.totalorder %s15, 0
    %p82 = por %p80, %p81
    %s83 = ssub.s32 %s16, %s28
    %s84 = ssub.s32 %s17, %s24
    %s85 = sor.u32 %s83, %s84
    %p86 = scmp.eq.s32.totalorder %s85, 0
    %s88 = sadd.s32 %s87, 1
    %s89 = scalar_select %p86, %s87, %s88
    %p92 = pneg %p86
    %p93 = scmp.eq.s32.totalorder %s9, 1
    %p94 = por %p92, %p93
    %p95 = scmp.ne.s32.totalorder %s87, %s90
    %p96 = scmp.eq.s32.totalorder %s9, 0
    %p97 = por %p95, %p96
    %p98 = scmp.ne.s32.totalorder %s87, %s90
    %p99 = scmp.eq.s32.totalorder %s14, 1
    %p100 = por %p98, %p99
    %p101 = scmp.ne.s32.totalorder %s90, %s91
    %p102 = scmp.eq.s32.totalorder %s14, 0
    %p103 = por %p101, %p102
    %p104 = scmp.ne.s32.totalorder %s90, %s91
    %p105 = scmp.eq.s32.totalorder %s15, 1
    %p106 = por %p104, %p105
    %p108 = scmp.ne.s32.totalorder %s91, %s107
    %p109 = scmp.eq.s32.totalorder %s15, 0
    %p110 = por %p108, %p109
    %s111 = ssub.s32 %s16, %s28
    %p112 = scmp.eq.s32.totalorder %s111, 0
    %s114 = sadd.s32 %s113, 1
    %s115 = scalar_select %p112, %s113, %s114
    %p118 = pneg %p112
    %p119 = scmp.eq.s32.totalorder %s9, 1
    %p120 = por %p118, %p119
    %p121 = scmp.ne.s32.totalorder %s113, %s116
    %p122 = scmp.eq.s32.totalorder %s9, 0
    %p123 = por %p121, %p122
    %p124 = scmp.ne.s32.totalorder %s113, %s116
    %p125 = scmp.eq.s32.totalorder %s14, 1
    %p126 = por %p124, %p125
    %p127 = scmp.ne.s32.totalorder %s116, %s117
    %p128 = scmp.eq.s32.totalorder %s14, 0
    %p129 = por %p127, %p128
    %p130 = scmp.ne.s32.totalorder %s116, %s117
    %p131 = scmp.eq.s32.totalorder %s15, 1
    %p132 = por %p130, %p131
    %p134 = scmp.ne.s32.totalorder %s117, %s133
    %p135 = scmp.eq.s32.totalorder %s15, 0
    %p136 = por %p134, %p135
    %p137 = scmp.le.s32.totalorder 1, %s9
    %p138 = scmp.lt.s32.totalorder %s9, 3
    %p139 = pnand %p137, %p138
    %p140 = pneg %p139
    // Predicated region
    $region9: #{tokenformer_forward.6} parent=5 // pred_check
      _
    $region10: #{tokenformer_forward.6} parent=5 // pred_check_branch
      %142 = sbr.rel (%p139) target = $region12
    $region11: #{tokenformer_forward.6} parent=5 // pred_region
      %s143 = ssub.s32 %s9, 1
    $region12: #{tokenformer_forward.6} parent=5 // pred_fallthru
      _
    %p144 = scmp.lt.s32.totalorder %s9, 2
    // Predicated region
    $region13: #{tokenformer_forward.6} parent=5 // pred_check
      %p145 = pneg %p144
    $region14: #{tokenformer_forward.6} parent=5 // pred_check_branch
      %147 = sbr.rel (%p145) target = $region16
    $region15: #{tokenformer_forward.6} parent=5 // pred_region
      // Predicated region
      $region17: #{tokenformer_forward.6} parent=15 // pred_check
        %p148 = pneg %p41
      $region18: #{tokenformer_forward.6} parent=15 // pred_check_branch
        %150 = sbr.rel (%p148) target = $region20
      $region19: #{tokenformer_forward.6} parent=15 // pred_region
        %p151 = scmp.lt.s32.totalorder %s16, 1
        %s152 = scalar_select %p151, %s16, 1
        %s153 = smul.addr %s152, 4
        %s154 = scalar_lea.vmem %s0, %s153
      $region20: #{tokenformer_forward.6} parent=15 // pred_fallthru
        _
      // Predicated region
      $region21: #{tokenformer_forward.6} parent=15 // pred_check
        %p155 = pneg %p69
      $region22: #{tokenformer_forward.6} parent=15 // pred_check_branch
        %157 = sbr.rel (%p155) target = $region24
      $region23: #{tokenformer_forward.6} parent=15 // pred_region
        %p158 = scmp.lt.s32.totalorder %s16, 1
        %s159 = scalar_select %p158, %s16, 1
        %p160 = scmp.lt.s32.totalorder %s17, 0
        %s161 = scalar_select %p160, %s17, 0
        %s162 = sadd.s32 %s161, %s159
        %s163 = smul.addr %s162, 4
        %s164 = scalar_lea.vmem %s1, %s163
      $region24: #{tokenformer_forward.6} parent=15 // pred_fallthru
        _
      // Predicated region
      $region25: #{tokenformer_forward.6} parent=15 // pred_check
        %p165 = pneg %p97
      $region26: #{tokenformer_forward.6} parent=15 // pred_check_branch
        %167 = sbr.rel (%p165) target = $region28
      $region27: #{tokenformer_forward.6} parent=15 // pred_region
        %p168 = scmp.lt.s32.totalorder %s16, 1
        %s169 = scalar_select %p168, %s16, 1
        %p170 = scmp.lt.s32.totalorder %s17, 0
        %s171 = scalar_select %p170, %s17, 0
        %s172 = sadd.s32 %s171, %s169
        %s173 = smul.addr %s172, 4
        %s174 = scalar_lea.vmem %s2, %s173
      $region28: #{tokenformer_forward.6} parent=15 // pred_fallthru
        _
    $region16: #{tokenformer_forward.6} parent=5 // pred_fallthru
      _
    %p175 = scmp.le.s32.totalorder 1, %s9
    %p176 = scmp.lt.s32.totalorder %s9, 3
    %p177 = pnand %p175, %p176
    %p178 = pneg %p177
    // Predicated region
    $region29: #{tokenformer_forward.6} parent=5 // pred_check
      _
    $region30: #{tokenformer_forward.6} parent=5 // pred_check_branch
      %180 = sbr.rel (%p177) target = $region32
    $region31: #{tokenformer_forward.6} parent=5 // pred_region
      %s181 = ssub.s32 %s9, 1
      %p182 = scmp.lt.s32.totalorder %s18, 1
      %s183 = scalar_select %p182, %s18, 1
      %s184 = smul.addr %s183, 4
      %s185 = scalar_lea.vmem %s0, %s184
      %p186 = pneg %p47
      %p187 = pneg %p44
      %p188 = scmp.lt.s32.totalorder %s18, 1
      %s189 = scalar_select %p188, %s18, 1
      %p190 = scmp.lt.s32.totalorder %s19, 0
      %s191 = scalar_select %p190, %s19, 0
      %s192 = sadd.s32 %s191, %s189
      %s193 = smul.addr %s192, 4
      %s194 = scalar_lea.vmem %s1, %s193
      %p195 = pneg %p75
      %p196 = pneg %p72
      %p197 = scmp.lt.s32.totalorder %s18, 1
      %s198 = scalar_select %p197, %s18, 1
      %p199 = scmp.lt.s32.totalorder %s19, 0
      %s200 = scalar_select %p199, %s19, 0
      %s201 = sadd.s32 %s200, %s198
      %s202 = smul.addr %s201, 4
      %s203 = scalar_lea.vmem %s2, %s202
      %p204 = pneg %p103
      %p205 = pneg %p100
      %p206 = pneg %p129
      %p207 = pneg %p126
      %p208 = scmp.lt.s32.totalorder %s18, 1
      %s209 = scalar_select %p208, %s18, 1
      %s210 = smul.addr %s209, 4
      %s211 = scalar_lea.vmem %s3, %s210
      %p212 = scmp.lt.s32.totalorder %s18, 1
      %s213 = scalar_select %p212, %s18, 1
      %s214 = smul.addr %s213, 4
      %s215 = scalar_lea.vmem %s0, %s214
      %p216 = scmp.lt.s32.totalorder %s18, 1
      %s217 = scalar_select %p216, %s18, 1
      %p218 = scmp.lt.s32.totalorder %s19, 0
      %s219 = scalar_select %p218, %s19, 0
      %s220 = sadd.s32 %s219, %s217
      %s221 = smul.addr %s220, 4
      %s222 = scalar_lea.vmem %s1, %s221
      %p223 = scmp.lt.s32.totalorder %s18, 1
      %s224 = scalar_select %p223, %s18, 1
      %p225 = scmp.lt.s32.totalorder %s19, 0
      %s226 = scalar_select %p225, %s19, 0
      %s227 = sadd.s32 %s226, %s224
      %s228 = smul.addr %s227, 4
      %s229 = scalar_lea.vmem %s2, %s228
      %p230 = scmp.lt.s32.totalorder %s18, 1
      %s231 = scalar_select %p230, %s18, 1
      %s232 = smul.addr %s231, 4
      %s233 = scalar_lea.vmem %s3, %s232
      %p235 = scmp.eq.s32.totalorder %s19, 0
      // Predicated region
      $region33: #{tokenformer_forward.6} parent=31 // pred_check
        %p236 = pneg %p235
      $region34: #{tokenformer_forward.6} parent=31 // pred_check_branch
        %238 = sbr.rel (%p236) target = $region36
      $region35: #{tokenformer_forward.6} parent=31 // pred_region
        %vm239 = vcmask 7168
        %240 = vst.msk [vmem:[#allocation2] sm:$0xff] %vm239, -inf
        %241 = vst.msk [vmem:[#allocation2 + $0x8] sm:$0xff] %vm239, -inf
        %242 = vst.msk [vmem:[#allocation2 + $0x10] sm:$0xff] %vm239, -inf
        %243 = vst.msk [vmem:[#allocation2 + $0x18] sm:$0xff] %vm239, -inf
        %244 = vst.msk [vmem:[#allocation3] sm:$0xff] %vm239, 0.0
        %245 = vst.msk [vmem:[#allocation3 + $0x8] sm:$0xff] %vm239, 0.0
        %246 = vst.msk [vmem:[#allocation3 + $0x10] sm:$0xff] %vm239, 0.0
        %247 = vst.msk [vmem:[#allocation3 + $0x18] sm:$0xff] %vm239, 0.0
        %vm248 = vcmask 64512
        %249 = vst.msk [vmem:[#allocation4] sm:$0xff] %vm248, 0.0
        %250 = vst.msk [vmem:[#allocation4 + $0x8] sm:$0xff] %vm248, 0.0
        %251 = vst.msk [vmem:[#allocation4 + $0x10] sm:$0xff] %vm248, 0.0
        %252 = vst.msk [vmem:[#allocation4 + $0x18] sm:$0xff] %vm248, 0.0
      $region36: #{tokenformer_forward.6} parent=31 // pred_fallthru
        _
      %v253 = vld [vmem:[%s215] sm:$0xf]
      %v254 = vld [vmem:[%s222] sm:$0xf]
      %v255 = vld [vmem:[%s229] sm:$0xf]
      %vm256 = vcmask 64512
      %v258 = vsel %vm256, %v253, 0
      %v261 = vsel %vm256, %v254, 0
      %263 = vmatprep.subr.bf16.mxu0 0
      %264 = vmatpush1.bf16.xpose.msra.mxu0 %v261
      %265 = vmatprep.subr.bf16.mxu0 0
      %266 = vmatpush1.bf16.xpose.msra.mxu0 0
      %267 = vmatprep.subr.bf16.mxu0 0
      %268 = vmatpush1.bf16.xpose.msra.mxu0 0
      %269 = vmatprep.subr.bf16.mxu0 0
      %270 = vmatpush1.bf16.xpose.msra.mxu0 0
      %271 = vmatprep.subr.bf16.mxu0 0
      %272 = vmatpush1.bf16.xpose.msra.mxu0 0
      %273 = vmatprep.subr.bf16.mxu0 0
      %274 = vmatpush1.bf16.xpose.msra.mxu0 0
      %275 = vmatprep.subr.bf16.mxu0 0
      %276 = vmatpush1.bf16.xpose.msra.mxu0 0
      %277 = vmatprep.subr.bf16.mxu0 0
      %278 = vmatpush1.bf16.xpose.msra.mxu0 0
      %279 = vmatprep.subr.bf16.mxu0 0
      %280 = vmatpush1.bf16.xpose.msra.mxu0 0
      %281 = vmatprep.subr.bf16.mxu0 0
      %282 = vmatpush1.bf16.xpose.msra.mxu0 0
      %283 = vmatprep.subr.bf16.mxu0 0
      %284 = vmatpush1.bf16.xpose.msra.mxu0 0
      %285 = vmatprep.subr.bf16.mxu0 0
      %286 = vmatpush1.bf16.xpose.msra.mxu0 0
      %287 = vmatprep.subr.bf16.mxu0 0
      %288 = vmatpush1.bf16.xpose.msra.mxu0 0
      %289 = vmatprep.subr.bf16.mxu0 0
      %290 = vmatpush1.bf16.xpose.msra.mxu0 0
      %291 = vmatprep.subr.bf16.mxu0 0
      %292 = vmatpush1.bf16.xpose.msra.mxu0 0
      %293 = vmatprep.subr.bf16.mxu0 0
      %294 = vmatpush1.bf16.xpose.msra.mxu0 0
      %295 = vmatprep.mubr.bf16.mxu0 0
      %296 = vmatmul.mubr.bf16.gmra.mrb[0].mxu0 %v258
      %v297 = vpop.f32.mrb[0].mxu0
      %v298 = vadd.f32 0.0, %v297
      %v299 = vpop.f32.mrb[0].mxu0
      %v300 = vpop.f32.mrb[0].mxu0
      %v301 = vpop.f32.mrb[0].mxu0
      %302 = vdwg.mxu0
      %v303 = vmul.f32 %v298, 0.35355338
      %v304 = vld [vmem:[#allocation2] sm:$0xff]
      %v305 = vsel %vm256, %v303, -inf
      %306 = vmax.xlane.f32.xlu0 %v305
      %v307 = vpop.xlane.xlu0 %306
      %v308 = vmax.f32 %v304, %v307
      %v309 = vsub.f32 %v304, %v308
      %v310 = vmul.f32 %v309, 1.442695
      %v311 = vpow.pop %v310
      %313 = vset.pattern.permute.xlu0 0
      %314 = vperm.xlu0 %313, %v308
      %v315 = vpop.permute.xlu0 %314
      %v317 = vsub.f32 %v303, %v315
      %v318 = vmul.f32 %v317, 1.442695
      %v319 = vpow.pop %v318
      %v320 = vld [vmem:[#allocation3] sm:$0xff]
      %v321 = vmul.f32 %v311, %v320
      %v322 = vsel %vm256, %v319, 0.0
      %323 = vadd.xlane.f32.xlu0 %v322
      %v324 = vpop.xlane.xlu0 %323
      %v325 = vadd.f32 %v321, %v324
      %vm326 = vcmask 7168
      %327 = vst.msk [vmem:[#allocation3] sm:$0xff] %vm326, %v325
      %v328 = vld [vmem:[#allocation4] sm:$0xff]
      %330 = vset.pattern.permute.xlu0 0
      %331 = vperm.xlu0 %330, %v311
      %v332 = vpop.permute.xlu0 %331
      %v334 = vmul.f32 %v332, %v328
      %v335 = vpack.c.bf16 %v319, %v319
      %v337 = vsel %vm256, %v335, 0
      %vm339 = vcmask 1043456
      %v341 = vsel %vm339, %v255, 0
      %343 = vmatprep.subr.bf16.mxu0 0
      %344 = vmatpush1.bf16.msra.mxu0 %v341
      %345 = vmatprep.subr.bf16.mxu0 0
      %346 = vmatpush1.bf16.msra.mxu0 0
      %347 = vmatprep.subr.bf16.mxu0 0
      %348 = vmatpush1.bf16.msra.mxu0 0
      %349 = vmatprep.subr.bf16.mxu0 0
      %350 = vmatpush1.bf16.msra.mxu0 0
      %351 = vmatprep.subr.bf16.mxu0 0
      %352 = vmatpush1.bf16.msra.mxu0 0
      %353 = vmatprep.subr.bf16.mxu0 0
      %354 = vmatpush1.bf16.msra.mxu0 0
      %355 = vmatprep.subr.bf16.mxu0 0
      %356 = vmatpush1.bf16.msra.mxu0 0
      %357 = vmatprep.subr.bf16.mxu0 0
      %358 = vmatpush1.bf16.msra.mxu0 0
      %359 = vmatprep.subr.bf16.mxu0 0
      %360 = vmatpush1.bf16.msra.mxu0 0
      %361 = vmatprep.subr.bf16.mxu0 0
      %362 = vmatpush1.bf16.msra.mxu0 0
      %363 = vmatprep.subr.bf16.mxu0 0
      %364 = vmatpush1.bf16.msra.mxu0 0
      %365 = vmatprep.subr.bf16.mxu0 0
      %366 = vmatpush1.bf16.msra.mxu0 0
      %367 = vmatprep.subr.bf16.mxu0 0
      %368 = vmatpush1.bf16.msra.mxu0 0
      %369 = vmatprep.subr.bf16.mxu0 0
      %370 = vmatpush1.bf16.msra.mxu0 0
      %371 = vmatprep.subr.bf16.mxu0 0
      %372 = vmatpush1.bf16.msra.mxu0 0
      %373 = vmatprep.subr.bf16.mxu0 0
      %374 = vmatpush1.bf16.msra.mxu0 0
      %375 = vmatprep.mubr.bf16.mxu0 0
      %376 = vmatmul.mubr.bf16.gmra.mrb[0].mxu0 %v337
      %v377 = vpop.f32.mrb[0].mxu0
      %v378 = vadd.f32 0.0, %v377
      %v379 = vpop.f32.mrb[0].mxu0
      %v380 = vpop.f32.mrb[0].mxu0
      %v381 = vpop.f32.mrb[0].mxu0
      %382 = vdwg.mxu0
      %v383 = vadd.f32 %v334, %v378
      %384 = vst.msk [vmem:[#allocation4] sm:$0xff] %vm256, %v383
      %385 = vst.msk [vmem:[#allocation2] sm:$0xff] %vm326, %v308
      %v387 = vunpack.c.l.b16 %v253
      %v388 = vpack.c.b16 %v387, %v387
      %389 = vrot.lane.b32.xlu0 %v388, 120
      %v390 = vpop.permute.xlu0 %389
      %v392 = vunpack.c.l.b16 %v254
      %v393 = vpack.c.b16 %v392, %v392
      %394 = vrot.lane.b32.xlu0 %v393, 120
      %v395 = vpop.permute.xlu0 %394
      %v397 = vsel %vm256, %v390, 0
      %v400 = vsel %vm256, %v395, 0
      %402 = vmatprep.subr.bf16.mxu0 0
      %403 = vmatpush1.bf16.xpose.msra.mxu0 %v400
      %404 = vmatprep.subr.bf16.mxu0 0
      %405 = vmatpush1.bf16.xpose.msra.mxu0 0
      %406 = vmatprep.subr.bf16.mxu0 0
      %407 = vmatpush1.bf16.xpose.msra.mxu0 0
      %408 = vmatprep.subr.bf16.mxu0 0
      %409 = vmatpush1.bf16.xpose.msra.mxu0 0
      %410 = vmatprep.subr.bf16.mxu0 0
      %411 = vmatpush1.bf16.xpose.msra.mxu0 0
      %412 = vmatprep.subr.bf16.mxu0 0
      %413 = vmatpush1.bf16.xpose.msra.mxu0 0
      %414 = vmatprep.subr.bf16.mxu0 0
      %415 = vmatpush1.bf16.xpose.msra.mxu0 0
      %416 = vmatprep.subr.bf16.mxu0 0
      %417 = vmatpush1.bf16.xpose.msra.mxu0 0
      %418 = vmatprep.subr.bf16.mxu0 0
      %419 = vmatpush1.bf16.xpose.msra.mxu0 0
      %420 = vmatprep.subr.bf16.mxu0 0
      %421 = vmatpush1.bf16.xpose.msra.mxu0 0
      %422 = vmatprep.subr.bf16.mxu0 0
      %423 = vmatpush1.bf16.xpose.msra.mxu0 0
      %424 = vmatprep.subr.bf16.mxu0 0
      %425 = vmatpush1.bf16.xpose.msra.mxu0 0
      %426 = vmatprep.subr.bf16.mxu0 0
      %427 = vmatpush1.bf16.xpose.msra.mxu0 0
      %428 = vmatprep.subr.bf16.mxu0 0
      %429 = vmatpush1.bf16.xpose.msra.mxu0 0
      %430 = vmatprep.subr.bf16.mxu0 0
      %431 = vmatpush1.bf16.xpose.msra.mxu0 0
      %432 = vmatprep.subr.bf16.mxu0 0
      %433 = vmatpush1.bf16.xpose.msra.mxu0 0
      %434 = vmatprep.mubr.bf16.mxu0 0
      %435 = vmatmul.mubr.bf16.gmra.mrb[0].mxu0 %v397
      %v436 = vpop.f32.mrb[0].mxu0
      %v437 = vadd.f32 0.0, %v436
      %v438 = vpop.f32.mrb[0].mxu0
      %v439 = vpop.f32.mrb[0].mxu0
      %v440 = vpop.f32.mrb[0].mxu0
      %441 = vdwg.mxu0
      %v442 = vmul.f32 %v437, 0.35355338
      %s443 = scalar_lea.vmem [#allocation2], 8
      %v444 = vld [vmem:[%s443] sm:$0xff]
      %v445 = vsel %vm256, %v442, -inf
      %446 = vmax.xlane.f32.xlu0 %v445
      %v447 = vpop.xlane.xlu0 %446
      %v448 = vmax.f32 %v444, %v447
      %v449 = vsub.f32 %v444, %v448
      %v450 = vmul.f32 %v449, 1.442695
      %v451 = vpow.pop %v450
      %453 = vset.pattern.permute.xlu0 0
      %454 = vperm.xlu0 %453, %v448
      %v455 = vpop.permute.xlu0 %454
      %v457 = vsub.f32 %v442, %v455
      %v458 = vmul.f32 %v457, 1.442695
      %v459 = vpow.pop %v458
      %s460 = scalar_lea.vmem [#allocation3], 8
      %v461 = vld [vmem:[%s460] sm:$0xff]
      %v462 = vmul.f32 %v451, %v461
      %v463 = vsel %vm256, %v459, 0.0
      %464 = vadd.xlane.f32.xlu0 %v463
      %v465 = vpop.xlane.xlu0 %464
      %v466 = vadd.f32 %v462, %v465
      %467 = vst.msk [vmem:[%s460] sm:$0xff] %vm326, %v466
      %s468 = scalar_lea.vmem [#allocation4], 8
      %v469 = vld [vmem:[%s468] sm:$0xff]
      %471 = vset.pattern.permute.xlu0 0
      %472 = vperm.xlu0 %471, %v451
      %v473 = vpop.permute.xlu0 %472
      %v475 = vmul.f32 %v473, %v469
      %v476 = vpack.c.bf16 %v459, %v459
      %v478 = vunpack.c.l.b16 %v255
      %v479 = vpack.c.b16 %v478, %v478
      %480 = vrot.lane.b32.xlu0 %v479, 120
      %v481 = vpop.permute.xlu0 %480
      %v483 = vsel %vm256, %v476, 0
      %v486 = vsel %vm339, %v481, 0
      %488 = vmatprep.subr.bf16.mxu0 0
      %489 = vmatpush1.bf16.msra.mxu0 %v486
      %490 = vmatprep.subr.bf16.mxu0 0
      %491 = vmatpush1.bf16.msra.mxu0 0
      %492 = vmatprep.subr.bf16.mxu0 0
      %493 = vmatpush1.bf16.msra.mxu0 0
      %494 = vmatprep.subr.bf16.mxu0 0
      %495 = vmatpush1.bf16.msra.mxu0 0
      %496 = vmatprep.subr.bf16.mxu0 0
      %497 = vmatpush1.bf16.msra.mxu0 0
      %498 = vmatprep.subr.bf16.mxu0 0
      %499 = vmatpush1.bf16.msra.mxu0 0
      %500 = vmatprep.subr.bf16.mxu0 0
      %501 = vmatpush1.bf16.msra.mxu0 0
      %502 = vmatprep.subr.bf16.mxu0 0
      %503 = vmatpush1.bf16.msra.mxu0 0
      %504 = vmatprep.subr.bf16.mxu0 0
      %505 = vmatpush1.bf16.msra.mxu0 0
      %506 = vmatprep.subr.bf16.mxu0 0
      %507 = vmatpush1.bf16.msra.mxu0 0
      %508 = vmatprep.subr.bf16.mxu0 0
      %509 = vmatpush1.bf16.msra.mxu0 0
      %510 = vmatprep.subr.bf16.mxu0 0
      %511 = vmatpush1.bf16.msra.mxu0 0
      %512 = vmatprep.subr.bf16.mxu0 0
      %513 = vmatpush1.bf16.msra.mxu0 0
      %514 = vmatprep.subr.bf16.mxu0 0
      %515 = vmatpush1.bf16.msra.mxu0 0
      %516 = vmatprep.subr.bf16.mxu0 0
      %517 = vmatpush1.bf16.msra.mxu0 0
      %518 = vmatprep.subr.bf16.mxu0 0
      %519 = vmatpush1.bf16.msra.mxu0 0
      %520 = vmatprep.mubr.bf16.mxu0 0
      %521 = vmatmul.mubr.bf16.gmra.mrb[0].mxu0 %v483
      %v522 = vpop.f32.mrb[0].mxu0
      %v523 = vadd.f32 0.0, %v522
      %v524 = vpop.f32.mrb[0].mxu0
      %v525 = vpop.f32.mrb[0].mxu0
      %v526 = vpop.f32.mrb[0].mxu0
      %527 = vdwg.mxu0
      %v528 = vadd.f32 %v475, %v523
      %529 = vst.msk [vmem:[%s468] sm:$0xff] %vm256, %v528
      %530 = vst.msk [vmem:[%s443] sm:$0xff] %vm326, %v448
      %531 = vrot.lane.b32.xlu0 %v388, 112
      %v532 = vpop.permute.xlu0 %531
      %533 = vrot.lane.b32.xlu0 %v393, 112
      %v534 = vpop.permute.xlu0 %533
      %v536 = vsel %vm256, %v532, 0
      %v539 = vsel %vm256, %v534, 0
      %541 = vmatprep.subr.bf16.mxu0 0
      %542 = vmatpush1.bf16.xpose.msra.mxu0 %v539
      %543 = vmatprep.subr.bf16.mxu0 0
      %544 = vmatpush1.bf16.xpose.msra.mxu0 0
      %545 = vmatprep.subr.bf16.mxu0 0
      %546 = vmatpush1.bf16.xpose.msra.mxu0 0
      %547 = vmatprep.subr.bf16.mxu0 0
      %548 = vmatpush1.bf16.xpose.msra.mxu0 0
      %549 = vmatprep.subr.bf16.mxu0 0
      %550 = vmatpush1.bf16.xpose.msra.mxu0 0
      %551 = vmatprep.subr.bf16.mxu0 0
      %552 = vmatpush1.bf16.xpose.msra.mxu0 0
      %553 = vmatprep.subr.bf16.mxu0 0
      %554 = vmatpush1.bf16.xpose.msra.mxu0 0
      %555 = vmatprep.subr.bf16.mxu0 0
      %556 = vmatpush1.bf16.xpose.msra.mxu0 0
      %557 = vmatprep.subr.bf16.mxu0 0
      %558 = vmatpush1.bf16.xpose.msra.mxu0 0
      %559 = vmatprep.subr.bf16.mxu0 0
      %560 = vmatpush1.bf16.xpose.msra.mxu0 0
      %561 = vmatprep.subr.bf16.mxu0 0
      %562 = vmatpush1.bf16.xpose.msra.mxu0 0
      %563 = vmatprep.subr.bf16.mxu0 0
      %564 = vmatpush1.bf16.xpose.msra.mxu0 0
      %565 = vmatprep.subr.bf16.mxu0 0
      %566 = vmatpush1.bf16.xpose.msra.mxu0 0
      %567 = vmatprep.subr.bf16.mxu0 0
      %568 = vmatpush1.bf16.xpose.msra.mxu0 0
      %569 = vmatprep.subr.bf16.mxu0 0
      %570 = vmatpush1.bf16.xpose.msra.mxu0 0
      %571 = vmatprep.subr.bf16.mxu0 0
      %572 = vmatpush1.bf16.xpose.msra.mxu0 0
      %573 = vmatprep.mubr.bf16.mxu0 0
      %574 = vmatmul.mubr.bf16.gmra.mrb[0].mxu0 %v536
      %v575 = vpop.f32.mrb[0].mxu0
      %v576 = vadd.f32 0.0, %v575
      %v577 = vpop.f32.mrb[0].mxu0
      %v578 = vpop.f32.mrb[0].mxu0
      %v579 = vpop.f32.mrb[0].mxu0
      %580 = vdwg.mxu0
      %v581 = vmul.f32 %v576, 0.35355338
      %s582 = scalar_lea.vmem [#allocation2], 16
      %v583 = vld [vmem:[%s582] sm:$0xff]
      %v584 = vsel %vm256, %v581, -inf
      %585 = vmax.xlane.f32.xlu0 %v584
      %v586 = vpop.xlane.xlu0 %585
      %v587 = vmax.f32 %v583, %v586
      %v588 = vsub.f32 %v583, %v587
      %v589 = vmul.f32 %v588, 1.442695
      %v590 = vpow.pop %v589
      %592 = vset.pattern.permute.xlu0 0
      %593 = vperm.xlu0 %592, %v587
      %v594 = vpop.permute.xlu0 %593
      %v596 = vsub.f32 %v581, %v594
      %v597 = vmul.f32 %v596, 1.442695
      %v598 = vpow.pop %v597
      %s599 = scalar_lea.vmem [#allocation3], 16
      %v600 = vld [vmem:[%s599] sm:$0xff]
      %v601 = vmul.f32 %v590, %v600
      %v602 = vsel %vm256, %v598, 0.0
      %603 = vadd.xlane.f32.xlu0 %v602
      %v604 = vpop.xlane.xlu0 %603
      %v605 = vadd.f32 %v601, %v604
      %606 = vst.msk [vmem:[%s599] sm:$0xff] %vm326, %v605
      %s607 = scalar_lea.vmem [#allocation4], 16
      %v608 = vld [vmem:[%s607] sm:$0xff]
      %610 = vset.pattern.permute.xlu0 0
      %611 = vperm.xlu0 %610, %v590
      %v612 = vpop.permute.xlu0 %611
      %v614 = vmul.f32 %v612, %v608
      %v615 = vpack.c.bf16 %v598, %v598
      %616 = vrot.lane.b32.xlu0 %v479, 112
      %v617 = vpop.permute.xlu0 %616
      %v619 = vsel %vm256, %v615, 0
      %v622 = vsel %vm339, %v617, 0
      %624 = vmatprep.subr.bf16.mxu0 0
      %625 = vmatpush1.bf16.msra.mxu0 %v622
      %626 = vmatprep.subr.bf16.mxu0 0
      %627 = vmatpush1.bf16.msra.mxu0 0
      %628 = vmatprep.subr.bf16.mxu0 0
      %629 = vmatpush1.bf16.msra.mxu0 0
      %630 = vmatprep.subr.bf16.mxu0 0
      %631 = vmatpush1.bf16.msra.mxu0 0
      %632 = vmatprep.subr.bf16.mxu0 0
      %633 = vmatpush1.bf16.msra.mxu0 0
      %634 = vmatprep.subr.bf16.mxu0 0
      %635 = vmatpush1.bf16.msra.mxu0 0
      %636 = vmatprep.subr.bf16.mxu0 0
      %637 = vmatpush1.bf16.msra.mxu0 0
      %638 = vmatprep.subr.bf16.mxu0 0
      %639 = vmatpush1.bf16.msra.mxu0 0
      %640 = vmatprep.subr.bf16.mxu0 0
      %641 = vmatpush1.bf16.msra.mxu0 0
      %642 = vmatprep.subr.bf16.mxu0 0
      %643 = vmatpush1.bf16.msra.mxu0 0
      %644 = vmatprep.subr.bf16.mxu0 0
      %645 = vmatpush1.bf16.msra.mxu0 0
      %646 = vmatprep.subr.bf16.mxu0 0
      %647 = vmatpush1.bf16.msra.mxu0 0
      %648 = vmatprep.subr.bf16.mxu0 0
      %649 = vmatpush1.bf16.msra.mxu0 0
      %650 = vmatprep.subr.bf16.mxu0 0
      %651 = vmatpush1.bf16.msra.mxu0 0
      %652 = vmatprep.subr.bf16.mxu0 0
      %653 = vmatpush1.bf16.msra.mxu0 0
      %654 = vmatprep.subr.bf16.mxu0 0
      %655 = vmatpush1.bf16.msra.mxu0 0
      %656 = vmatprep.mubr.bf16.mxu0 0
      %657 = vmatmul.mubr.bf16.gmra.mrb[0].mxu0 %v619
      %v658 = vpop.f32.mrb[0].mxu0
      %v659 = vadd.f32 0.0, %v658
      %v660 = vpop.f32.mrb[0].mxu0
      %v661 = vpop.f32.mrb[0].mxu0
      %v662 = vpop.f32.mrb[0].mxu0
      %663 = vdwg.mxu0
      %v664 = vadd.f32 %v614, %v659
      %665 = vst.msk [vmem:[%s607] sm:$0xff] %vm256, %v664
      %666 = vst.msk [vmem:[%s582] sm:$0xff] %vm326, %v587
      %667 = vrot.lane.b32.xlu0 %v388, 104
      %v668 = vpop.permute.xlu0 %667
      %669 = vrot.lane.b32.xlu0 %v393, 104
      %v670 = vpop.permute.xlu0 %669
      %v672 = vsel %vm256, %v668, 0
      %v675 = vsel %vm256, %v670, 0
      %677 = vmatprep.subr.bf16.mxu0 0
      %678 = vmatpush1.bf16.xpose.msra.mxu0 %v675
      %679 = vmatprep.subr.bf16.mxu0 0
      %680 = vmatpush1.bf16.xpose.msra.mxu0 0
      %681 = vmatprep.subr.bf16.mxu0 0
      %682 = vmatpush1.bf16.xpose.msra.mxu0 0
      %683 = vmatprep.subr.bf16.mxu0 0
      %684 = vmatpush1.bf16.xpose.msra.mxu0 0
      %685 = vmatprep.subr.bf16.mxu0 0
      %686 = vmatpush1.bf16.xpose.msra.mxu0 0
      %687 = vmatprep.subr.bf16.mxu0 0
      %688 = vmatpush1.bf16.xpose.msra.mxu0 0
      %689 = vmatprep.subr.bf16.mxu0 0
      %690 = vmatpush1.bf16.xpose.msra.mxu0 0
      %691 = vmatprep.subr.bf16.mxu0 0
      %692 = vmatpush1.bf16.xpose.msra.mxu0 0
      %693 = vmatprep.subr.bf16.mxu0 0
      %694 = vmatpush1.bf16.xpose.msra.mxu0 0
      %695 = vmatprep.subr.bf16.mxu0 0
      %696 = vmatpush1.bf16.xpose.msra.mxu0 0
      %697 = vmatprep.subr.bf16.mxu0 0
      %698 = vmatpush1.bf16.xpose.msra.mxu0 0
      %699 = vmatprep.subr.bf16.mxu0 0
      %700 = vmatpush1.bf16.xpose.msra.mxu0 0
      %701 = vmatprep.subr.bf16.mxu0 0
      %702 = vmatpush1.bf16.xpose.msra.mxu0 0
      %703 = vmatprep.subr.bf16.mxu0 0
      %704 = vmatpush1.bf16.xpose.msra.mxu0 0
      %705 = vmatprep.subr.bf16.mxu0 0
      %706 = vmatpush1.bf16.xpose.msra.mxu0 0
      %707 = vmatprep.subr.bf16.mxu0 0
      %708 = vmatpush1.bf16.xpose.msra.mxu0 0
      %709 = vmatprep.mubr.bf16.mxu0 0
      %710 = vmatmul.mubr.bf16.gmra.mrb[0].mxu0 %v672
      %v711 = vpop.f32.mrb[0].mxu0
      %v712 = vadd.f32 0.0, %v711
      %v713 = vpop.f32.mrb[0].mxu0
      %v714 = vpop.f32.mrb[0].mxu0
      %v715 = vpop.f32.mrb[0].mxu0
      %716 = vdwg.mxu0
      %v717 = vmul.f32 %v712, 0.35355338
      %s718 = scalar_lea.vmem [#allocation2], 24
      %v719 = vld [vmem:[%s718] sm:$0xff]
      %v720 = vsel %vm256, %v717, -inf
      %721 = vmax.xlane.f32.xlu0 %v720
      %v722 = vpop.xlane.xlu0 %721
      %v723 = vmax.f32 %v719, %v722
      %v724 = vsub.f32 %v719, %v723
      %v725 = vmul.f32 %v724, 1.442695
      %v726 = vpow.pop %v725
      %728 = vset.pattern.permute.xlu0 0
      %729 = vperm.xlu0 %728, %v723
      %v730 = vpop.permute.xlu0 %729
      %v732 = vsub.f32 %v717, %v730
      %v733 = vmul.f32 %v732, 1.442695
      %v734 = vpow.pop %v733
      %s735 = scalar_lea.vmem [#allocation3], 24
      %v736 = vld [vmem:[%s735] sm:$0xff]
      %v737 = vmul.f32 %v726, %v736
      %v738 = vsel %vm256, %v734, 0.0
      %739 = vadd.xlane.f32.xlu0 %v738
      %v740 = vpop.xlane.xlu0 %739
      %v741 = vadd.f32 %v737, %v740
      %742 = vst.msk [vmem:[%s735] sm:$0xff] %vm326, %v741
      %s743 = scalar_lea.vmem [#allocation4], 24
      %v744 = vld [vmem:[%s743] sm:$0xff]
      %746 = vset.pattern.permute.xlu0 0
      %747 = vperm.xlu0 %746, %v726
      %v748 = vpop.permute.xlu0 %747
      %v750 = vmul.f32 %v748, %v744
      %v751 = vpack.c.bf16 %v734, %v734
      %752 = vrot.lane.b32.xlu0 %v479, 104
      %v753 = vpop.permute.xlu0 %752
      %v755 = vsel %vm256, %v751, 0
      %v758 = vsel %vm339, %v753, 0
      %760 = vmatprep.subr.bf16.mxu0 0
      %761 = vmatpush1.bf16.msra.mxu0 %v758
      %762 = vmatprep.subr.bf16.mxu0 0
      %763 = vmatpush1.bf16.msra.mxu0 0
      %764 = vmatprep.subr.bf16.mxu0 0
      %765 = vmatpush1.bf16.msra.mxu0 0
      %766 = vmatprep.subr.bf16.mxu0 0
      %767 = vmatpush1.bf16.msra.mxu0 0
      %768 = vmatprep.subr.bf16.mxu0 0
      %769 = vmatpush1.bf16.msra.mxu0 0
      %770 = vmatprep.subr.bf16.mxu0 0
      %771 = vmatpush1.bf16.msra.mxu0 0
      %772 = vmatprep.subr.bf16.mxu0 0
      %773 = vmatpush1.bf16.msra.mxu0 0
      %774 = vmatprep.subr.bf16.mxu0 0
      %775 = vmatpush1.bf16.msra.mxu0 0
      %776 = vmatprep.subr.bf16.mxu0 0
      %777 = vmatpush1.bf16.msra.mxu0 0
      %778 = vmatprep.subr.bf16.mxu0 0
      %779 = vmatpush1.bf16.msra.mxu0 0
      %780 = vmatprep.subr.bf16.mxu0 0
      %781 = vmatpush1.bf16.msra.mxu0 0
      %782 = vmatprep.subr.bf16.mxu0 0
      %783 = vmatpush1.bf16.msra.mxu0 0
      %784 = vmatprep.subr.bf16.mxu0 0
      %785 = vmatpush1.bf16.msra.mxu0 0
      %786 = vmatprep.subr.bf16.mxu0 0
      %787 = vmatpush1.bf16.msra.mxu0 0
      %788 = vmatprep.subr.bf16.mxu0 0
      %789 = vmatpush1.bf16.msra.mxu0 0
      %790 = vmatprep.subr.bf16.mxu0 0
      %791 = vmatpush1.bf16.msra.mxu0 0
      %792 = vmatprep.mubr.bf16.mxu0 0
      %793 = vmatmul.mubr.bf16.gmra.mrb[0].mxu0 %v755
      %v794 = vpop.f32.mrb[0].mxu0
      %v795 = vadd.f32 0.0, %v794
      %v796 = vpop.f32.mrb[0].mxu0
      %v797 = vpop.f32.mrb[0].mxu0
      %v798 = vpop.f32.mrb[0].mxu0
      %799 = vdwg.mxu0
      %v800 = vadd.f32 %v750, %v795
      %801 = vst.msk [vmem:[%s743] sm:$0xff] %vm256, %v800
      %802 = vst.msk [vmem:[%s718] sm:$0xff] %vm326, %v723
      // Predicated region
      $region37: #{tokenformer_forward.6} parent=31 // pred_check
        %p803 = pneg %p235
      $region38: #{tokenformer_forward.6} parent=31 // pred_check_branch
        %805 = sbr.rel (%p803) target = $region40
      $region39: #{tokenformer_forward.6} parent=31 // pred_region
        %v806 = vld [vmem:[#allocation3] sm:$0xff]
        %v807 = vrcp.pop %v806
        %v808 = vld [vmem:[#allocation4] sm:$0xff]
        %810 = vset.pattern.permute.xlu0 0
        %811 = vperm.xlu0 %810, %v807
        %v812 = vpop.permute.xlu0 %811
        %v814 = vmul.f32 %v808, %v812
        %v815 = vpack.c.bf16 %v814, %v814
        %vm816 = vcmask 60416
        %817 = vst.msk [vmem:[%s233] sm:$0xf] %vm816, %v815
        %v818 = vld [vmem:[%s460] sm:$0xff]
        %v819 = vrcp.pop %v818
        %v820 = vld [vmem:[%s468] sm:$0xff]
        %822 = vset.pattern.permute.xlu0 0
        %823 = vperm.xlu0 %822, %v819
        %v824 = vpop.permute.xlu0 %823
        %v826 = vmul.f32 %v820, %v824
        %v827 = vpack.c.bf16 %v826, %v826
        %v829 = vunpack.c.l.b16 %v827
        %v830 = vpack.c.b16 %v829, %v829
        %831 = vrot.lane.b32.xlu0 %v830, 8
        %v832 = vpop.permute.xlu0 %831
        %vm834 = vcmask 126016
        %835 = vst.msk [vmem:[%s233] sm:$0xf] %vm834, %v832
        %v836 = vld [vmem:[%s599] sm:$0xff]
        %v837 = vrcp.pop %v836
        %v838 = vld [vmem:[%s607] sm:$0xff]
        %840 = vset.pattern.permute.xlu0 0
        %841 = vperm.xlu0 %840, %v837
        %v842 = vpop.permute.xlu0 %841
        %v844 = vmul.f32 %v838, %v842
        %v845 = vpack.c.bf16 %v844, %v844
        %v847 = vunpack.c.l.b16 %v845
        %v848 = vpack.c.b16 %v847, %v847
        %849 = vrot.lane.b32.xlu0 %v848, 16
        %v850 = vpop.permute.xlu0 %849
        %vm852 = vcmask 191616
        %853 = vst.msk [vmem:[%s233] sm:$0xf] %vm852, %v850
        %v854 = vld [vmem:[%s735] sm:$0xff]
        %v855 = vrcp.pop %v854
        %v856 = vld [vmem:[%s743] sm:$0xff]
        %858 = vset.pattern.permute.xlu0 0
        %859 = vperm.xlu0 %858, %v855
        %v860 = vpop.permute.xlu0 %859
        %v862 = vmul.f32 %v856, %v860
        %v863 = vpack.c.bf16 %v862, %v862
        %v865 = vunpack.c.l.b16 %v863
        %v866 = vpack.c.b16 %v865, %v865
        %867 = vrot.lane.b32.xlu0 %v866, 24
        %v868 = vpop.permute.xlu0 %867
        %vm870 = vcmask 257216
        %871 = vst.msk [vmem:[%s233] sm:$0xf] %vm870, %v868
      $region40: #{tokenformer_forward.6} parent=31 // pred_fallthru
        _
      %p872 = scmp.lt.s32.totalorder %s18, 1
      %s873 = scalar_select %p872, %s18, 1
      %s874 = smul.addr %s873, 4
      %s875 = scalar_lea.vmem %s3, %s874
      // Predicated region
      $region41: #{tokenformer_forward.6} parent=31 // pred_check
        %p876 = pneg %p126
      $region42: #{tokenformer_forward.6} parent=31 // pred_check_branch
        %878 = sbr.rel (%p876) target = $region44
      $region43: #{tokenformer_forward.6} parent=31 // pred_region
        _
      $region44: #{tokenformer_forward.6} parent=31 // pred_fallthru
        _
    $region32: #{tokenformer_forward.6} parent=5 // pred_fallthru
      _
    %p879 = scmp.le.s32.totalorder 2, %s9
    // Predicated region
    $region45: #{tokenformer_forward.6} parent=5 // pred_check
      %p880 = pneg %p879
    $region46: #{tokenformer_forward.6} parent=5 // pred_check_branch
      %882 = sbr.rel (%p880) target = $region48
    $region47: #{tokenformer_forward.6} parent=5 // pred_region
      %s883 = ssub.s32 %s9, 2
      // Predicated region
      $region49: #{tokenformer_forward.6} parent=47 // pred_check
        %p884 = pneg %p132
      $region50: #{tokenformer_forward.6} parent=47 // pred_check_branch
        %886 = sbr.rel (%p884) target = $region52
      $region51: #{tokenformer_forward.6} parent=47 // pred_region
        %p887 = scmp.lt.s32.totalorder %s20, 1
        %s888 = scalar_select %p887, %s20, 1
        %s889 = smul.addr %s888, 4
        %s890 = scalar_lea.vmem %s3, %s889
      $region52: #{tokenformer_forward.6} parent=47 // pred_fallthru
        _
    $region48: #{tokenformer_forward.6} parent=5 // pred_fallthru
      _
  $region6: #{tokenformer_forward.6} parent=0 // loop_footer
    %s13 = sadd.s32 1, %s9
  $region7: #{tokenformer_forward.6} parent=0 // loop_footer_branch
    %8 = sbr.rel target = $region3
  $region8: #{tokenformer_forward.6} parent=0 // loop_exit
    _

</llo_original>
